<compile_context>
chip_gen: v6e
topology: v6e:2x2x1
jax: 0.10.0
libtpu: 0.0.40
codegen_flags: <defaults>
</compile_context>

<pallas_src>
from functools import partial

import jax
import jax.numpy as jnp
import numpy as np
from jax.experimental import pallas as pl
from jax.experimental.pallas import tpu as pltpu

VMEM = pl.BlockSpec(memory_space=pltpu.MemorySpace.VMEM)


# --------------------------- fused forward kernel ---------------------------
def make_fused_kernel(num_layers, B_pad, T, H, C):
    H2, H4, H6, H8 = 2 * H, 4 * H, 6 * H, 8 * H

    def kernel(*refs):
        idx = 0
        xpair_ref = refs[idx]; idx += 1
        layer_w = []
        for _ in range(num_layers):
            layer_w.append(refs[idx:idx + 3]); idx += 3
        wa1, ba1, wa2, ba2, w1c, b1c, w2b, b2b = refs[idx:idx + 8]; idx += 8
        out_ref = refs[idx]

        def mm(a, w, b=None):
            # bf16 MXU operands, f32 accumulation.
            y = jnp.dot(a.astype(jnp.bfloat16), w,
                        preferred_element_type=jnp.float32)
            if b is not None:
                y = y + b
            return y

        # ------------------- stacked bidirectional LSTM ---------------------
        # xpair row block t holds [x(t) | x(T-1-t)]; the per-layer weight is
        # (2*D, 8H) zero-block structured, so one hoisted matmul yields, per
        # row block t, the fwd input gates at time t and the bwd input gates
        # at time T-1-t already in the fused gate-column layout.
        xpair = xpair_ref[...]                              # (T*B_pad, 2*D) bf16
        act = None                                          # per-real-time (B_pad, 2H)
        for li, (win_ref, whh_ref, b_ref) in enumerate(layer_w):
            gin = mm(xpair, win_ref[...], b_ref[...])       # (T*B_pad, 8H) f32
            whh = whh_ref[...]                              # (2H, 8H) bf16 block-diag
            h = jnp.zeros((B_pad, H2), jnp.float32)         # [h_f | h_b]
            c = jnp.zeros((B_pad, H2), jnp.float32)         # [c_f | c_b]
            hstep = []
            for t in range(T):                              # static unroll; state in vregs
                g = gin[t * B_pad:(t + 1) * B_pad, :] + mm(h, whh)
                s = jax.nn.sigmoid(g[:, 0:H6])              # [i_f,i_b,f_f,f_b,o_f,o_b]
                gt = jnp.tanh(g[:, H6:H8])                  # [g_f, g_b]
                c = s[:, H2:H4] * c + s[:, 0:H2] * gt
                h = s[:, H4:H6] * jnp.tanh(c)
                hstep.append(h)
            # Re-associate halves to real time: fwd half of step t is time t,
            # bwd half of step t is time T-1-t.
            act = [jnp.concatenate([hstep[t][:, 0:H],
                                    hstep[T - 1 - t][:, H:H2]], axis=1)
                   for t in range(T)]
            if li + 1 < num_layers:
                # next layer's doubled-width input [act(t) | act(T-1-t)]
                xpair = jnp.concatenate(
                    [jnp.concatenate([act[t], act[T - 1 - t]], axis=1)
                     for t in range(T)], axis=0)            # (T*B_pad, 4H) f32
            # TODO(synk): inter-layer LSTM dropout (p=0.4) is an eval-mode identity.

        lstm_flat = jnp.concatenate(act, axis=0)            # (T*B_pad, 2H) f32

        # --------------------- attention pooling (batched) ------------------
        h1 = jnp.tanh(mm(lstm_flat, wa1[...], ba1[...]))    # (T*B_pad, H)
        sc = mm(h1, wa2[...], ba2[...])                     # (T*B_pad, 1)
        # regroup scores to (B_pad, T): value slices + one lane concat
        sc_bt = jnp.concatenate(
            [sc[t * B_pad:(t + 1) * B_pad, :] for t in range(T)], axis=1)
        m = jnp.max(sc_bt, axis=1, keepdims=True)
        e = jnp.exp(sc_bt - m)
        # approx reciprocal is well within the 2e-2 test tolerance
        attn = e * pl.reciprocal(jnp.sum(e, axis=1, keepdims=True), approx=True)
        wfeat = attn[:, 0:1] * act[0]
        for t in range(1, T):
            wfeat = wfeat + attn[:, t:t + 1] * act[t]       # (B_pad, 2H)

        # ------------------------ fused output heads ------------------------
        # TODO(synk): head Dropout(0.5) is an eval-mode identity.
        hh = jnp.maximum(mm(wfeat, w1c[...], b1c[...]), 0.0)      # (B_pad, 3H)
        out_all = mm(hh, w2b[...], b2b[...])                      # (B_pad, C+2)
        out_ref[...] = jnp.concatenate(
            [out_all[:, 0:C + 1], jax.nn.sigmoid(out_all[:, C + 1:C + 2])],
            axis=1)

    return kernel


# --------------------------- parameter preparation ---------------------------
def prepare_kernel_params(lstm_params, head_params, hidden_size, num_classes):
    """Convert reference-layout params (PyTorch gate order (i,f,g,o), (in,out)
    weights) into the fused-kernel layout.  Runs ONCE (hoisted out of forward)."""
    H = hidden_size
    C = num_classes

    def place(w, direction):
        # w: (R, 4H) with gate column order (i, f, g, o).  Output: (R, 8H) in
        # interleaved layout [i_f,i_b, f_f,f_b, o_f,o_b, g_f,g_b], with zeros
        # in the other direction's columns.
        i, f, g, o = w[:, 0:H], w[:, H:2 * H], w[:, 2 * H:3 * H], w[:, 3 * H:4 * H]
        z = jnp.zeros_like(i)
        blocks = []
        for blk in (i, f, o, g):
            blocks += ([blk, z] if direction == 0 else [z, blk])
        return jnp.concatenate(blocks, axis=1)

    lstm_args = []
    for fwd, bwd in lstm_params:
        wih_f, whh_f, b_f = fwd
        wih_b, whh_b, b_b = bwd
        w_in = jnp.concatenate([place(wih_f, 0), place(wih_b, 1)], axis=0)  # (2D, 8H)
        w_hh = jnp.concatenate([place(whh_f, 0), place(whh_b, 1)], axis=0)  # (2H, 8H)
        bias = place(b_f, 0) + place(b_b, 1)                                # (1, 8H)
        lstm_args += [w_in.astype(jnp.bfloat16),
                      w_hh.astype(jnp.bfloat16),
                      bias.astype(jnp.float32)]

    (wa1, ba1, wa2, ba2, wc1, bc1, wc2, bc2,
     wd1, bd1, wd2, bd2, wp1, bp1, wp2, bp2) = head_params
    w1c = jnp.concatenate([wc1, wd1, wp1], axis=1)                 # (2H, 3H)
    b1c = jnp.concatenate([bc1, bd1, bp1], axis=1)                 # (1, 3H)
    w2b = jnp.zeros((3 * H, C + 2), jnp.float32)
    w2b = w2b.at[0:H, 0:C].set(wc2)
    w2b = w2b.at[H:2 * H, C:C + 1].set(wd2)
    w2b = w2b.at[2 * H:3 * H, C + 1:C + 2].set(wp2)
    b2b = jnp.concatenate([bc2, bd2, bp2], axis=1)                 # (1, C+2)
    head_args = [wa1.astype(jnp.bfloat16), ba1,
                 wa2.astype(jnp.bfloat16), ba2,
                 w1c.astype(jnp.bfloat16), b1c,
                 w2b.astype(jnp.bfloat16), b2b]
    return lstm_args, head_args


# ------------------------------ full forward --------------------------------
@partial(jax.jit, static_argnames=("hidden_size", "num_classes"))
def forward(x, lstm_args, head_args, *, hidden_size, num_classes):
    """x: (B, T, input_size), batch_first like the PyTorch module.
    lstm_args / head_args come from prepare_kernel_params (called once)."""
    B, T, D = x.shape
    H = hidden_size
    C = num_classes
    num_layers = len(lstm_args) // 3
    B_pad = ((B + 7) // 8) * 8                     # pad batch to 8 sublanes

    # Layout prep (cheap, once per call): time-major, batch-padded,
    # doubled-width rows [x(t) | x(T-1-t)], cast to bf16 for the MXU.
    x_t = jnp.transpose(x, (1, 0, 2))              # (T, B, D)
    if B_pad != B:
        x_t = jnp.pad(x_t, ((0, 0), (0, B_pad - B), (0, 0)))
    x_pair = jnp.concatenate([x_t, x_t[::-1]], axis=-1)          # (T, B_pad, 2D)
    x_pair = x_pair.reshape(T * B_pad, 2 * D).astype(jnp.bfloat16)

    args = (x_pair, *lstm_args, *head_args)
    kernel = make_fused_kernel(num_layers, B_pad, T, H, C)
    out = pl.pallas_call(
        kernel,
        out_shape=jax.ShapeDtypeStruct((B_pad, C + 2), jnp.float32),
        in_specs=[VMEM] * len(args),
        out_specs=VMEM,
    )(*args)
    # Single fused output; split (and drop batch padding) outside the kernel.
    comp = out[:B, 0:C]
    days = out[:B, C:C + 1]
    prob = out[:B, C + 1:C + 2]
    return comp, days, prob


# ----------------------------- parameter init -------------------------------
def init_params(key, input_size, hidden_size, num_layers, num_classes):
    k = 1.0 / np.sqrt(hidden_size)
    keys = iter(jax.random.split(key, 64))

    def u(shape):
        return jax.random.uniform(next(keys), shape, jnp.float32, -k, k)

    lstm_params = []
    for layer in range(num_layers):
        in_dim = input_size if layer == 0 else 2 * hidden_size
        dirs = []
        for _ in range(2):                                    # fwd / bwd
            w_ih_t = u((in_dim, 4 * hidden_size))             # (in, 4H), gates (i,f,g,o)
            w_hh_t = u((hidden_size, 4 * hidden_size))
            b = u((1, 4 * hidden_size)) + u((1, 4 * hidden_size))  # b_ih + b_hh
            dirs.append((w_ih_t, w_hh_t, b))
        lstm_params.append(tuple(dirs))

    def linear(fin, fout):
        return u((fin, fout)), u((1, fout))

    H2 = 2 * hidden_size
    wa1, ba1 = linear(H2, hidden_size); wa2, ba2 = linear(hidden_size, 1)
    wc1, bc1 = linear(H2, hidden_size); wc2, bc2 = linear(hidden_size, num_classes)
    wd1, bd1 = linear(H2, hidden_size); wd2, bd2 = linear(hidden_size, 1)
    wp1, bp1 = linear(H2, hidden_size); wp2, bp2 = linear(hidden_size, 1)
    head_params = [wa1, ba1, wa2, ba2, wc1, bc1, wc2, bc2,
                   wd1, bd1, wd2, bd2, wp1, bp1, wp2, bp2]
    return lstm_params, head_params


# --------------------------- pure-JAX reference -----------------------------
def _ref_lstm_dir(x_tbd, w_ih_t, w_hh_t, b):
    T, B, _ = x_tbd.shape
    H = w_hh_t.shape[0]
    h = jnp.zeros((B, H), jnp.float32)
    c = jnp.zeros((B, H), jnp.float32)
    outs = []
    for t in range(T):
        gates = x_tbd[t] @ w_ih_t + h @ w_hh_t + b
        i = jax.nn.sigmoid(gates[:, 0:H])
        f = jax.nn.sigmoid(gates[:, H:2 * H])
        g = jnp.tanh(gates[:, 2 * H:3 * H])
        o = jax.nn.sigmoid(gates[:, 3 * H:4 * H])
        c = f * c + i * g
        h = o * jnp.tanh(c)
        outs.append(h)
    return jnp.stack(outs, axis=0)


def ref_forward(x, lstm_params, head_params):
    (wa1, ba1, wa2, ba2, wc1, bc1, wc2, bc2,
     wd1, bd1, wd2, bd2, wp1, bp1, wp2, bp2) = head_params
    h = jnp.transpose(x, (1, 0, 2))
    for fwd, bwd in lstm_params:
        out_f = _ref_lstm_dir(h, *fwd)
        out_b = _ref_lstm_dir(h[::-1], *bwd)[::-1]
        h = jnp.concatenate([out_f, out_b], axis=-1)
    lstm_out = jnp.transpose(h, (1, 0, 2))                    # (B, T, 2H)
    sc = jnp.tanh(lstm_out @ wa1 + ba1) @ wa2 + ba2           # (B, T, 1)
    attn = jax.nn.softmax(sc, axis=1)
    wfeat = jnp.sum(lstm_out * attn, axis=1)                  # (B, 2H)
    comp = jnp.maximum(wfeat @ wc1 + bc1, 0.0) @ wc2 + bc2
    days = jnp.maximum(wfeat @ wd1 + bd1, 0.0) @ wd2 + bd2
    prob = jax.nn.sigmoid(jnp.maximum(wfeat @ wp1 + bp1, 0.0) @ wp2 + bp2)
    return comp, days, prob


if __name__ == "__main__":
    input_size, hidden_size, num_layers, num_classes = 16, 32, 2, 3
    B, T = 2, 8

    key = jax.random.PRNGKey(0)
    kx, kp = jax.random.split(key)
    x = jax.random.normal(kx, (B, T, input_size), jnp.float32)
    lstm_params, head_params = init_params(kp, input_size, hidden_size,
                                           num_layers, num_classes)

    # Hoisted: gate permutes / block-diag builds / bf16 casts run once.
    lstm_args, head_args = prepare_kernel_params(lstm_params, head_params,
                                                 hidden_size, num_classes)

    comp, days, prob = forward(x, lstm_args, head_args,
                               hidden_size=hidden_size, num_classes=num_classes)
    jax.block_until_ready((comp, days, prob))

    assert comp.shape == (B, num_classes)
    assert days.shape == (B, 1)
    assert prob.shape == (B, 1)

    rc, rd, rp = ref_forward(x, lstm_params, head_params)
    np.testing.assert_allclose(np.asarray(comp), np.asarray(rc), atol=2e-2, rtol=2e-2)
    np.testing.assert_allclose(np.asarray(days), np.asarray(rd), atol=2e-2, rtol=2e-2)
    np.testing.assert_allclose(np.asarray(prob), np.asarray(rp), atol=2e-2, rtol=2e-2)

    print("KERNEL_OK")
</pallas_src>

<mosaic_0001>
module attributes {stable_mosaic.version = 11 : i64} {
  func.func @kernel(%arg0: memref<64x32xbf16, #tpu.memory_space<vmem>>, %arg1: memref<32x256xbf16, #tpu.memory_space<vmem>>, %arg2: memref<64x256xbf16, #tpu.memory_space<vmem>>, %arg3: memref<1x256xf32, #tpu.memory_space<vmem>>, %arg4: memref<128x256xbf16, #tpu.memory_space<vmem>>, %arg5: memref<64x256xbf16, #tpu.memory_space<vmem>>, %arg6: memref<1x256xf32, #tpu.memory_space<vmem>>, %arg7: memref<64x32xbf16, #tpu.memory_space<vmem>>, %arg8: memref<1x32xf32, #tpu.memory_space<vmem>>, %arg9: memref<32x1xbf16, #tpu.memory_space<vmem>>, %arg10: memref<1x1xf32, #tpu.memory_space<vmem>>, %arg11: memref<64x96xbf16, #tpu.memory_space<vmem>>, %arg12: memref<1x96xf32, #tpu.memory_space<vmem>>, %arg13: memref<96x5xbf16, #tpu.memory_space<vmem>>, %arg14: memref<1x5xf32, #tpu.memory_space<vmem>>, %arg15: memref<8x5xf32, #tpu.memory_space<vmem>>) attributes {dimension_semantics = [], scalar_prefetch = 0 : i64, scratch_operands = 0 : i64, tpu.core_type = #tpu.core_type<tc>} {
    %c0 = arith.constant 0 : index
    %c0_0 = arith.constant 0 : index
    %0 = vector.load %arg0[%c0, %c0_0] : memref<64x32xbf16, #tpu.memory_space<vmem>>, vector<64x32xbf16>
    %c0_1 = arith.constant 0 : index
    %c0_2 = arith.constant 0 : index
    %1 = vector.load %arg1[%c0_1, %c0_2] : memref<32x256xbf16, #tpu.memory_space<vmem>>, vector<32x256xbf16>
    %c0_3 = arith.constant 0 : index
    %c0_4 = arith.constant 0 : index
    %2 = vector.load %arg3[%c0_3, %c0_4] : memref<1x256xf32, #tpu.memory_space<vmem>>, vector<1x256xf32>
    %cst = arith.constant dense<0.000000e+00> : vector<64x256xf32>
    %3 = tpu.matmul %0, %1, %cst {dimension_numbers = #tpu.dot_dimension_numbers<[1], [0], [0], [1], [0, 0, 1, 1], [], []>} : vector<64x32xbf16>, vector<32x256xbf16>, vector<64x256xf32> -> vector<64x256xf32>
    %4 = vector.broadcast %2 : vector<1x256xf32> to vector<64x256xf32>
    %5 = arith.addf %3, %4 : vector<64x256xf32>
    %c0_5 = arith.constant 0 : index
    %c0_6 = arith.constant 0 : index
    %6 = vector.load %arg2[%c0_5, %c0_6] : memref<64x256xbf16, #tpu.memory_space<vmem>>, vector<64x256xbf16>
    %cst_7 = arith.constant 0.000000e+00 : f32
    %7 = vector.broadcast %cst_7 : f32 to vector<8x64xf32>
    %cst_8 = arith.constant 0.000000e+00 : f32
    %8 = vector.broadcast %cst_8 : f32 to vector<8x64xf32>
    %9 = vector.extract_strided_slice %5 {offsets = [0, 0], sizes = [8, 256], strides = [1, 1]} : vector<64x256xf32> to vector<8x256xf32>
    %10 = arith.truncf %7 : vector<8x64xf32> to vector<8x64xbf16>
    %cst_9 = arith.constant dense<0.000000e+00> : vector<8x256xf32>
    %11 = tpu.matmul %10, %6, %cst_9 {dimension_numbers = #tpu.dot_dimension_numbers<[1], [0], [0], [1], [0, 0, 1, 1], [], []>} : vector<8x64xbf16>, vector<64x256xbf16>, vector<8x256xf32> -> vector<8x256xf32>
    %12 = arith.addf %9, %11 : vector<8x256xf32>
    %13 = vector.extract_strided_slice %12 {offsets = [0, 0], sizes = [8, 192], strides = [1, 1]} : vector<8x256xf32> to vector<8x192xf32>
    %14 = arith.negf %13 : vector<8x192xf32>
    %15 = math.exp %14 : vector<8x192xf32>
    %cst_10 = arith.constant 1.000000e+00 : f32
    %16 = vector.broadcast %cst_10 : f32 to vector<8x192xf32>
    %17 = arith.addf %16, %15 : vector<8x192xf32>
    %18 = arith.divf %16, %17 : vector<8x192xf32>
    %19 = vector.extract_strided_slice %12 {offsets = [0, 192], sizes = [8, 64], strides = [1, 1]} : vector<8x256xf32> to vector<8x64xf32>
    %20 = math.tanh %19 : vector<8x64xf32>
    %21 = vector.extract_strided_slice %18 {offsets = [0, 64], sizes = [8, 64], strides = [1, 1]} : vector<8x192xf32> to vector<8x64xf32>
    %22 = arith.mulf %21, %8 : vector<8x64xf32>
    %23 = vector.extract_strided_slice %18 {offsets = [0, 0], sizes = [8, 64], strides = [1, 1]} : vector<8x192xf32> to vector<8x64xf32>
    %24 = arith.mulf %23, %20 : vector<8x64xf32>
    %25 = arith.addf %22, %24 : vector<8x64xf32>
    %26 = vector.extract_strided_slice %18 {offsets = [0, 128], sizes = [8, 64], strides = [1, 1]} : vector<8x192xf32> to vector<8x64xf32>
    %27 = math.tanh %25 : vector<8x64xf32>
    %28 = arith.mulf %26, %27 : vector<8x64xf32>
    %29 = vector.extract_strided_slice %5 {offsets = [8, 0], sizes = [8, 256], strides = [1, 1]} : vector<64x256xf32> to vector<8x256xf32>
    %30 = arith.truncf %28 : vector<8x64xf32> to vector<8x64xbf16>
    %cst_11 = arith.constant dense<0.000000e+00> : vector<8x256xf32>
    %31 = tpu.matmul %30, %6, %cst_11 {dimension_numbers = #tpu.dot_dimension_numbers<[1], [0], [0], [1], [0, 0, 1, 1], [], []>} : vector<8x64xbf16>, vector<64x256xbf16>, vector<8x256xf32> -> vector<8x256xf32>
    %32 = arith.addf %29, %31 : vector<8x256xf32>
    %33 = vector.extract_strided_slice %32 {offsets = [0, 0], sizes = [8, 192], strides = [1, 1]} : vector<8x256xf32> to vector<8x192xf32>
    %34 = arith.negf %33 : vector<8x192xf32>
    %35 = math.exp %34 : vector<8x192xf32>
    %cst_12 = arith.constant 1.000000e+00 : f32
    %36 = vector.broadcast %cst_12 : f32 to vector<8x192xf32>
    %37 = arith.addf %36, %35 : vector<8x192xf32>
    %38 = arith.divf %36, %37 : vector<8x192xf32>
    %39 = vector.extract_strided_slice %32 {offsets = [0, 192], sizes = [8, 64], strides = [1, 1]} : vector<8x256xf32> to vector<8x64xf32>
    %40 = math.tanh %39 : vector<8x64xf32>
    %41 = vector.extract_strided_slice %38 {offsets = [0, 64], sizes = [8, 64], strides = [1, 1]} : vector<8x192xf32> to vector<8x64xf32>
    %42 = arith.mulf %41, %25 : vector<8x64xf32>
    %43 = vector.extract_strided_slice %38 {offsets = [0, 0], sizes = [8, 64], strides = [1, 1]} : vector<8x192xf32> to vector<8x64xf32>
    %44 = arith.mulf %43, %40 : vector<8x64xf32>
    %45 = arith.addf %42, %44 : vector<8x64xf32>
    %46 = vector.extract_strided_slice %38 {offsets = [0, 128], sizes = [8, 64], strides = [1, 1]} : vector<8x192xf32> to vector<8x64xf32>
    %47 = math.tanh %45 : vector<8x64xf32>
    %48 = arith.mulf %46, %47 : vector<8x64xf32>
    %49 = vector.extract_strided_slice %5 {offsets = [16, 0], sizes = [8, 256], strides = [1, 1]} : vector<64x256xf32> to vector<8x256xf32>
    %50 = arith.truncf %48 : vector<8x64xf32> to vector<8x64xbf16>
    %cst_13 = arith.constant dense<0.000000e+00> : vector<8x256xf32>
    %51 = tpu.matmul %50, %6, %cst_13 {dimension_numbers = #tpu.dot_dimension_numbers<[1], [0], [0], [1], [0, 0, 1, 1], [], []>} : vector<8x64xbf16>, vector<64x256xbf16>, vector<8x256xf32> -> vector<8x256xf32>
    %52 = arith.addf %49, %51 : vector<8x256xf32>
    %53 = vector.extract_strided_slice %52 {offsets = [0, 0], sizes = [8, 192], strides = [1, 1]} : vector<8x256xf32> to vector<8x192xf32>
    %54 = arith.negf %53 : vector<8x192xf32>
    %55 = math.exp %54 : vector<8x192xf32>
    %cst_14 = arith.constant 1.000000e+00 : f32
    %56 = vector.broadcast %cst_14 : f32 to vector<8x192xf32>
    %57 = arith.addf %56, %55 : vector<8x192xf32>
    %58 = arith.divf %56, %57 : vector<8x192xf32>
    %59 = vector.extract_strided_slice %52 {offsets = [0, 192], sizes = [8, 64], strides = [1, 1]} : vector<8x256xf32> to vector<8x64xf32>
    %60 = math.tanh %59 : vector<8x64xf32>
    %61 = vector.extract_strided_slice %58 {offsets = [0, 64], sizes = [8, 64], strides = [1, 1]} : vector<8x192xf32> to vector<8x64xf32>
    %62 = arith.mulf %61, %45 : vector<8x64xf32>
    %63 = vector.extract_strided_slice %58 {offsets = [0, 0], sizes = [8, 64], strides = [1, 1]} : vector<8x192xf32> to vector<8x64xf32>
    %64 = arith.mulf %63, %60 : vector<8x64xf32>
    %65 = arith.addf %62, %64 : vector<8x64xf32>
    %66 = vector.extract_strided_slice %58 {offsets = [0, 128], sizes = [8, 64], strides = [1, 1]} : vector<8x192xf32> to vector<8x64xf32>
    %67 = math.tanh %65 : vector<8x64xf32>
    %68 = arith.mulf %66, %67 : vector<8x64xf32>
    %69 = vector.extract_strided_slice %5 {offsets = [24, 0], sizes = [8, 256], strides = [1, 1]} : vector<64x256xf32> to vector<8x256xf32>
    %70 = arith.truncf %68 : vector<8x64xf32> to vector<8x64xbf16>
    %cst_15 = arith.constant dense<0.000000e+00> : vector<8x256xf32>
    %71 = tpu.matmul %70, %6, %cst_15 {dimension_numbers = #tpu.dot_dimension_numbers<[1], [0], [0], [1], [0, 0, 1, 1], [], []>} : vector<8x64xbf16>, vector<64x256xbf16>, vector<8x256xf32> -> vector<8x256xf32>
    %72 = arith.addf %69, %71 : vector<8x256xf32>
    %73 = vector.extract_strided_slice %72 {offsets = [0, 0], sizes = [8, 192], strides = [1, 1]} : vector<8x256xf32> to vector<8x192xf32>
    %74 = arith.negf %73 : vector<8x192xf32>
    %75 = math.exp %74 : vector<8x192xf32>
    %cst_16 = arith.constant 1.000000e+00 : f32
    %76 = vector.broadcast %cst_16 : f32 to vector<8x192xf32>
    %77 = arith.addf %76, %75 : vector<8x192xf32>
    %78 = arith.divf %76, %77 : vector<8x192xf32>
    %79 = vector.extract_strided_slice %72 {offsets = [0, 192], sizes = [8, 64], strides = [1, 1]} : vector<8x256xf32> to vector<8x64xf32>
    %80 = math.tanh %79 : vector<8x64xf32>
    %81 = vector.extract_strided_slice %78 {offsets = [0, 64], sizes = [8, 64], strides = [1, 1]} : vector<8x192xf32> to vector<8x64xf32>
    %82 = arith.mulf %81, %65 : vector<8x64xf32>
    %83 = vector.extract_strided_slice %78 {offsets = [0, 0], sizes = [8, 64], strides = [1, 1]} : vector<8x192xf32> to vector<8x64xf32>
    %84 = arith.mulf %83, %80 : vector<8x64xf32>
    %85 = arith.addf %82, %84 : vector<8x64xf32>
    %86 = vector.extract_strided_slice %78 {offsets = [0, 128], sizes = [8, 64], strides = [1, 1]} : vector<8x192xf32> to vector<8x64xf32>
    %87 = math.tanh %85 : vector<8x64xf32>
    %88 = arith.mulf %86, %87 : vector<8x64xf32>
    %89 = vector.extract_strided_slice %5 {offsets = [32, 0], sizes = [8, 256], strides = [1, 1]} : vector<64x256xf32> to vector<8x256xf32>
    %90 = arith.truncf %88 : vector<8x64xf32> to vector<8x64xbf16>
    %cst_17 = arith.constant dense<0.000000e+00> : vector<8x256xf32>
    %91 = tpu.matmul %90, %6, %cst_17 {dimension_numbers = #tpu.dot_dimension_numbers<[1], [0], [0], [1], [0, 0, 1, 1], [], []>} : vector<8x64xbf16>, vector<64x256xbf16>, vector<8x256xf32> -> vector<8x256xf32>
    %92 = arith.addf %89, %91 : vector<8x256xf32>
    %93 = vector.extract_strided_slice %92 {offsets = [0, 0], sizes = [8, 192], strides = [1, 1]} : vector<8x256xf32> to vector<8x192xf32>
    %94 = arith.negf %93 : vector<8x192xf32>
    %95 = math.exp %94 : vector<8x192xf32>
    %cst_18 = arith.constant 1.000000e+00 : f32
    %96 = vector.broadcast %cst_18 : f32 to vector<8x192xf32>
    %97 = arith.addf %96, %95 : vector<8x192xf32>
    %98 = arith.divf %96, %97 : vector<8x192xf32>
    %99 = vector.extract_strided_slice %92 {offsets = [0, 192], sizes = [8, 64], strides = [1, 1]} : vector<8x256xf32> to vector<8x64xf32>
    %100 = math.tanh %99 : vector<8x64xf32>
    %101 = vector.extract_strided_slice %98 {offsets = [0, 64], sizes = [8, 64], strides = [1, 1]} : vector<8x192xf32> to vector<8x64xf32>
    %102 = arith.mulf %101, %85 : vector<8x64xf32>
    %103 = vector.extract_strided_slice %98 {offsets = [0, 0], sizes = [8, 64], strides = [1, 1]} : vector<8x192xf32> to vector<8x64xf32>
    %104 = arith.mulf %103, %100 : vector<8x64xf32>
    %105 = arith.addf %102, %104 : vector<8x64xf32>
    %106 = vector.extract_strided_slice %98 {offsets = [0, 128], sizes = [8, 64], strides = [1, 1]} : vector<8x192xf32> to vector<8x64xf32>
    %107 = math.tanh %105 : vector<8x64xf32>
    %108 = arith.mulf %106, %107 : vector<8x64xf32>
    %109 = vector.extract_strided_slice %5 {offsets = [40, 0], sizes = [8, 256], strides = [1, 1]} : vector<64x256xf32> to vector<8x256xf32>
    %110 = arith.truncf %108 : vector<8x64xf32> to vector<8x64xbf16>
    %cst_19 = arith.constant dense<0.000000e+00> : vector<8x256xf32>
    %111 = tpu.matmul %110, %6, %cst_19 {dimension_numbers = #tpu.dot_dimension_numbers<[1], [0], [0], [1], [0, 0, 1, 1], [], []>} : vector<8x64xbf16>, vector<64x256xbf16>, vector<8x256xf32> -> vector<8x256xf32>
    %112 = arith.addf %109, %111 : vector<8x256xf32>
    %113 = vector.extract_strided_slice %112 {offsets = [0, 0], sizes = [8, 192], strides = [1, 1]} : vector<8x256xf32> to vector<8x192xf32>
    %114 = arith.negf %113 : vector<8x192xf32>
    %115 = math.exp %114 : vector<8x192xf32>
    %cst_20 = arith.constant 1.000000e+00 : f32
    %116 = vector.broadcast %cst_20 : f32 to vector<8x192xf32>
    %117 = arith.addf %116, %115 : vector<8x192xf32>
    %118 = arith.divf %116, %117 : vector<8x192xf32>
    %119 = vector.extract_strided_slice %112 {offsets = [0, 192], sizes = [8, 64], strides = [1, 1]} : vector<8x256xf32> to vector<8x64xf32>
    %120 = math.tanh %119 : vector<8x64xf32>
    %121 = vector.extract_strided_slice %118 {offsets = [0, 64], sizes = [8, 64], strides = [1, 1]} : vector<8x192xf32> to vector<8x64xf32>
    %122 = arith.mulf %121, %105 : vector<8x64xf32>
    %123 = vector.extract_strided_slice %118 {offsets = [0, 0], sizes = [8, 64], strides = [1, 1]} : vector<8x192xf32> to vector<8x64xf32>
    %124 = arith.mulf %123, %120 : vector<8x64xf32>
    %125 = arith.addf %122, %124 : vector<8x64xf32>
    %126 = vector.extract_strided_slice %118 {offsets = [0, 128], sizes = [8, 64], strides = [1, 1]} : vector<8x192xf32> to vector<8x64xf32>
    %127 = math.tanh %125 : vector<8x64xf32>
    %128 = arith.mulf %126, %127 : vector<8x64xf32>
    %129 = vector.extract_strided_slice %5 {offsets = [48, 0], sizes = [8, 256], strides = [1, 1]} : vector<64x256xf32> to vector<8x256xf32>
    %130 = arith.truncf %128 : vector<8x64xf32> to vector<8x64xbf16>
    %cst_21 = arith.constant dense<0.000000e+00> : vector<8x256xf32>
    %131 = tpu.matmul %130, %6, %cst_21 {dimension_numbers = #tpu.dot_dimension_numbers<[1], [0], [0], [1], [0, 0, 1, 1], [], []>} : vector<8x64xbf16>, vector<64x256xbf16>, vector<8x256xf32> -> vector<8x256xf32>
    %132 = arith.addf %129, %131 : vector<8x256xf32>
    %133 = vector.extract_strided_slice %132 {offsets = [0, 0], sizes = [8, 192], strides = [1, 1]} : vector<8x256xf32> to vector<8x192xf32>
    %134 = arith.negf %133 : vector<8x192xf32>
    %135 = math.exp %134 : vector<8x192xf32>
    %cst_22 = arith.constant 1.000000e+00 : f32
    %136 = vector.broadcast %cst_22 : f32 to vector<8x192xf32>
    %137 = arith.addf %136, %135 : vector<8x192xf32>
    %138 = arith.divf %136, %137 : vector<8x192xf32>
    %139 = vector.extract_strided_slice %132 {offsets = [0, 192], sizes = [8, 64], strides = [1, 1]} : vector<8x256xf32> to vector<8x64xf32>
    %140 = math.tanh %139 : vector<8x64xf32>
    %141 = vector.extract_strided_slice %138 {offsets = [0, 64], sizes = [8, 64], strides = [1, 1]} : vector<8x192xf32> to vector<8x64xf32>
    %142 = arith.mulf %141, %125 : vector<8x64xf32>
    %143 = vector.extract_strided_slice %138 {offsets = [0, 0], sizes = [8, 64], strides = [1, 1]} : vector<8x192xf32> to vector<8x64xf32>
    %144 = arith.mulf %143, %140 : vector<8x64xf32>
    %145 = arith.addf %142, %144 : vector<8x64xf32>
    %146 = vector.extract_strided_slice %138 {offsets = [0, 128], sizes = [8, 64], strides = [1, 1]} : vector<8x192xf32> to vector<8x64xf32>
    %147 = math.tanh %145 : vector<8x64xf32>
    %148 = arith.mulf %146, %147 : vector<8x64xf32>
    %149 = vector.extract_strided_slice %5 {offsets = [56, 0], sizes = [8, 256], strides = [1, 1]} : vector<64x256xf32> to vector<8x256xf32>
    %150 = arith.truncf %148 : vector<8x64xf32> to vector<8x64xbf16>
    %cst_23 = arith.constant dense<0.000000e+00> : vector<8x256xf32>
    %151 = tpu.matmul %150, %6, %cst_23 {dimension_numbers = #tpu.dot_dimension_numbers<[1], [0], [0], [1], [0, 0, 1, 1], [], []>} : vector<8x64xbf16>, vector<64x256xbf16>, vector<8x256xf32> -> vector<8x256xf32>
    %152 = arith.addf %149, %151 : vector<8x256xf32>
    %153 = vector.extract_strided_slice %152 {offsets = [0, 0], sizes = [8, 192], strides = [1, 1]} : vector<8x256xf32> to vector<8x192xf32>
    %154 = arith.negf %153 : vector<8x192xf32>
    %155 = math.exp %154 : vector<8x192xf32>
    %cst_24 = arith.constant 1.000000e+00 : f32
    %156 = vector.broadcast %cst_24 : f32 to vector<8x192xf32>
    %157 = arith.addf %156, %155 : vector<8x192xf32>
    %158 = arith.divf %156, %157 : vector<8x192xf32>
    %159 = vector.extract_strided_slice %152 {offsets = [0, 192], sizes = [8, 64], strides = [1, 1]} : vector<8x256xf32> to vector<8x64xf32>
    %160 = math.tanh %159 : vector<8x64xf32>
    %161 = vector.extract_strided_slice %158 {offsets = [0, 64], sizes = [8, 64], strides = [1, 1]} : vector<8x192xf32> to vector<8x64xf32>
    %162 = arith.mulf %161, %145 : vector<8x64xf32>
    %163 = vector.extract_strided_slice %158 {offsets = [0, 0], sizes = [8, 64], strides = [1, 1]} : vector<8x192xf32> to vector<8x64xf32>
    %164 = arith.mulf %163, %160 : vector<8x64xf32>
    %165 = arith.addf %162, %164 : vector<8x64xf32>
    %166 = vector.extract_strided_slice %158 {offsets = [0, 128], sizes = [8, 64], strides = [1, 1]} : vector<8x192xf32> to vector<8x64xf32>
    %167 = math.tanh %165 : vector<8x64xf32>
    %168 = arith.mulf %166, %167 : vector<8x64xf32>
    %169 = vector.extract_strided_slice %28 {offsets = [0, 0], sizes = [8, 32], strides = [1, 1]} : vector<8x64xf32> to vector<8x32xf32>
    %170 = vector.extract_strided_slice %168 {offsets = [0, 32], sizes = [8, 32], strides = [1, 1]} : vector<8x64xf32> to vector<8x32xf32>
    %171 = tpu.concatenate %169, %170 in 1 : vector<8x32xf32>, vector<8x32xf32> -> vector<8x64xf32>
    %172 = vector.extract_strided_slice %48 {offsets = [0, 0], sizes = [8, 32], strides = [1, 1]} : vector<8x64xf32> to vector<8x32xf32>
    %173 = vector.extract_strided_slice %148 {offsets = [0, 32], sizes = [8, 32], strides = [1, 1]} : vector<8x64xf32> to vector<8x32xf32>
    %174 = tpu.concatenate %172, %173 in 1 : vector<8x32xf32>, vector<8x32xf32> -> vector<8x64xf32>
    %175 = vector.extract_strided_slice %68 {offsets = [0, 0], sizes = [8, 32], strides = [1, 1]} : vector<8x64xf32> to vector<8x32xf32>
    %176 = vector.extract_strided_slice %128 {offsets = [0, 32], sizes = [8, 32], strides = [1, 1]} : vector<8x64xf32> to vector<8x32xf32>
    %177 = tpu.concatenate %175, %176 in 1 : vector<8x32xf32>, vector<8x32xf32> -> vector<8x64xf32>
    %178 = vector.extract_strided_slice %88 {offsets = [0, 0], sizes = [8, 32], strides = [1, 1]} : vector<8x64xf32> to vector<8x32xf32>
    %179 = vector.extract_strided_slice %108 {offsets = [0, 32], sizes = [8, 32], strides = [1, 1]} : vector<8x64xf32> to vector<8x32xf32>
    %180 = tpu.concatenate %178, %179 in 1 : vector<8x32xf32>, vector<8x32xf32> -> vector<8x64xf32>
    %181 = vector.extract_strided_slice %108 {offsets = [0, 0], sizes = [8, 32], strides = [1, 1]} : vector<8x64xf32> to vector<8x32xf32>
    %182 = vector.extract_strided_slice %88 {offsets = [0, 32], sizes = [8, 32], strides = [1, 1]} : vector<8x64xf32> to vector<8x32xf32>
    %183 = tpu.concatenate %181, %182 in 1 : vector<8x32xf32>, vector<8x32xf32> -> vector<8x64xf32>
    %184 = vector.extract_strided_slice %128 {offsets = [0, 0], sizes = [8, 32], strides = [1, 1]} : vector<8x64xf32> to vector<8x32xf32>
    %185 = vector.extract_strided_slice %68 {offsets = [0, 32], sizes = [8, 32], strides = [1, 1]} : vector<8x64xf32> to vector<8x32xf32>
    %186 = tpu.concatenate %184, %185 in 1 : vector<8x32xf32>, vector<8x32xf32> -> vector<8x64xf32>
    %187 = vector.extract_strided_slice %148 {offsets = [0, 0], sizes = [8, 32], strides = [1, 1]} : vector<8x64xf32> to vector<8x32xf32>
    %188 = vector.extract_strided_slice %48 {offsets = [0, 32], sizes = [8, 32], strides = [1, 1]} : vector<8x64xf32> to vector<8x32xf32>
    %189 = tpu.concatenate %187, %188 in 1 : vector<8x32xf32>, vector<8x32xf32> -> vector<8x64xf32>
    %190 = vector.extract_strided_slice %168 {offsets = [0, 0], sizes = [8, 32], strides = [1, 1]} : vector<8x64xf32> to vector<8x32xf32>
    %191 = vector.extract_strided_slice %28 {offsets = [0, 32], sizes = [8, 32], strides = [1, 1]} : vector<8x64xf32> to vector<8x32xf32>
    %192 = tpu.concatenate %190, %191 in 1 : vector<8x32xf32>, vector<8x32xf32> -> vector<8x64xf32>
    %193 = tpu.concatenate %171, %192 in 1 : vector<8x64xf32>, vector<8x64xf32> -> vector<8x128xf32>
    %194 = tpu.concatenate %174, %189 in 1 : vector<8x64xf32>, vector<8x64xf32> -> vector<8x128xf32>
    %195 = tpu.concatenate %177, %186 in 1 : vector<8x64xf32>, vector<8x64xf32> -> vector<8x128xf32>
    %196 = tpu.concatenate %180, %183 in 1 : vector<8x64xf32>, vector<8x64xf32> -> vector<8x128xf32>
    %197 = tpu.concatenate %183, %180 in 1 : vector<8x64xf32>, vector<8x64xf32> -> vector<8x128xf32>
    %198 = tpu.concatenate %186, %177 in 1 : vector<8x64xf32>, vector<8x64xf32> -> vector<8x128xf32>
    %199 = tpu.concatenate %189, %174 in 1 : vector<8x64xf32>, vector<8x64xf32> -> vector<8x128xf32>
    %200 = tpu.concatenate %192, %171 in 1 : vector<8x64xf32>, vector<8x64xf32> -> vector<8x128xf32>
    %201 = tpu.concatenate %193, %194, %195, %196, %197, %198, %199, %200 in 0 : vector<8x128xf32>, vector<8x128xf32>, vector<8x128xf32>, vector<8x128xf32>, vector<8x128xf32>, vector<8x128xf32>, vector<8x128xf32>, vector<8x128xf32> -> vector<64x128xf32>
    %c0_25 = arith.constant 0 : index
    %c0_26 = arith.constant 0 : index
    %202 = vector.load %arg4[%c0_25, %c0_26] : memref<128x256xbf16, #tpu.memory_space<vmem>>, vector<128x256xbf16>
    %c0_27 = arith.constant 0 : index
    %c0_28 = arith.constant 0 : index
    %203 = vector.load %arg6[%c0_27, %c0_28] : memref<1x256xf32, #tpu.memory_space<vmem>>, vector<1x256xf32>
    %204 = arith.truncf %201 : vector<64x128xf32> to vector<64x128xbf16>
    %cst_29 = arith.constant dense<0.000000e+00> : vector<64x256xf32>
    %205 = tpu.matmul %204, %202, %cst_29 {dimension_numbers = #tpu.dot_dimension_numbers<[1], [0], [0], [1], [0, 0, 1, 1], [], []>} : vector<64x128xbf16>, vector<128x256xbf16>, vector<64x256xf32> -> vector<64x256xf32>
    %206 = vector.broadcast %203 : vector<1x256xf32> to vector<64x256xf32>
    %207 = arith.addf %205, %206 : vector<64x256xf32>
    %c0_30 = arith.constant 0 : index
    %c0_31 = arith.constant 0 : index
    %208 = vector.load %arg5[%c0_30, %c0_31] : memref<64x256xbf16, #tpu.memory_space<vmem>>, vector<64x256xbf16>
    %cst_32 = arith.constant 0.000000e+00 : f32
    %209 = vector.broadcast %cst_32 : f32 to vector<8x64xf32>
    %cst_33 = arith.constant 0.000000e+00 : f32
    %210 = vector.broadcast %cst_33 : f32 to vector<8x64xf32>
    %211 = vector.extract_strided_slice %207 {offsets = [0, 0], sizes = [8, 256], strides = [1, 1]} : vector<64x256xf32> to vector<8x256xf32>
    %212 = arith.truncf %209 : vector<8x64xf32> to vector<8x64xbf16>
    %cst_34 = arith.constant dense<0.000000e+00> : vector<8x256xf32>
    %213 = tpu.matmul %212, %208, %cst_34 {dimension_numbers = #tpu.dot_dimension_numbers<[1], [0], [0], [1], [0, 0, 1, 1], [], []>} : vector<8x64xbf16>, vector<64x256xbf16>, vector<8x256xf32> -> vector<8x256xf32>
    %214 = arith.addf %211, %213 : vector<8x256xf32>
    %215 = vector.extract_strided_slice %214 {offsets = [0, 0], sizes = [8, 192], strides = [1, 1]} : vector<8x256xf32> to vector<8x192xf32>
    %216 = arith.negf %215 : vector<8x192xf32>
    %217 = math.exp %216 : vector<8x192xf32>
    %cst_35 = arith.constant 1.000000e+00 : f32
    %218 = vector.broadcast %cst_35 : f32 to vector<8x192xf32>
    %219 = arith.addf %218, %217 : vector<8x192xf32>
    %220 = arith.divf %218, %219 : vector<8x192xf32>
    %221 = vector.extract_strided_slice %214 {offsets = [0, 192], sizes = [8, 64], strides = [1, 1]} : vector<8x256xf32> to vector<8x64xf32>
    %222 = math.tanh %221 : vector<8x64xf32>
    %223 = vector.extract_strided_slice %220 {offsets = [0, 64], sizes = [8, 64], strides = [1, 1]} : vector<8x192xf32> to vector<8x64xf32>
    %224 = arith.mulf %223, %210 : vector<8x64xf32>
    %225 = vector.extract_strided_slice %220 {offsets = [0, 0], sizes = [8, 64], strides = [1, 1]} : vector<8x192xf32> to vector<8x64xf32>
    %226 = arith.mulf %225, %222 : vector<8x64xf32>
    %227 = arith.addf %224, %226 : vector<8x64xf32>
    %228 = vector.extract_strided_slice %220 {offsets = [0, 128], sizes = [8, 64], strides = [1, 1]} : vector<8x192xf32> to vector<8x64xf32>
    %229 = math.tanh %227 : vector<8x64xf32>
    %230 = arith.mulf %228, %229 : vector<8x64xf32>
    %231 = vector.extract_strided_slice %207 {offsets = [8, 0], sizes = [8, 256], strides = [1, 1]} : vector<64x256xf32> to vector<8x256xf32>
    %232 = arith.truncf %230 : vector<8x64xf32> to vector<8x64xbf16>
    %cst_36 = arith.constant dense<0.000000e+00> : vector<8x256xf32>
    %233 = tpu.matmul %232, %208, %cst_36 {dimension_numbers = #tpu.dot_dimension_numbers<[1], [0], [0], [1], [0, 0, 1, 1], [], []>} : vector<8x64xbf16>, vector<64x256xbf16>, vector<8x256xf32> -> vector<8x256xf32>
    %234 = arith.addf %231, %233 : vector<8x256xf32>
    %235 = vector.extract_strided_slice %234 {offsets = [0, 0], sizes = [8, 192], strides = [1, 1]} : vector<8x256xf32> to vector<8x192xf32>
    %236 = arith.negf %235 : vector<8x192xf32>
    %237 = math.exp %236 : vector<8x192xf32>
    %cst_37 = arith.constant 1.000000e+00 : f32
    %238 = vector.broadcast %cst_37 : f32 to vector<8x192xf32>
    %239 = arith.addf %238, %237 : vector<8x192xf32>
    %240 = arith.divf %238, %239 : vector<8x192xf32>
    %241 = vector.extract_strided_slice %234 {offsets = [0, 192], sizes = [8, 64], strides = [1, 1]} : vector<8x256xf32> to vector<8x64xf32>
    %242 = math.tanh %241 : vector<8x64xf32>
    %243 = vector.extract_strided_slice %240 {offsets = [0, 64], sizes = [8, 64], strides = [1, 1]} : vector<8x192xf32> to vector<8x64xf32>
    %244 = arith.mulf %243, %227 : vector<8x64xf32>
    %245 = vector.extract_strided_slice %240 {offsets = [0, 0], sizes = [8, 64], strides = [1, 1]} : vector<8x192xf32> to vector<8x64xf32>
    %246 = arith.mulf %245, %242 : vector<8x64xf32>
    %247 = arith.addf %244, %246 : vector<8x64xf32>
    %248 = vector.extract_strided_slice %240 {offsets = [0, 128], sizes = [8, 64], strides = [1, 1]} : vector<8x192xf32> to vector<8x64xf32>
    %249 = math.tanh %247 : vector<8x64xf32>
    %250 = arith.mulf %248, %249 : vector<8x64xf32>
    %251 = vector.extract_strided_slice %207 {offsets = [16, 0], sizes = [8, 256], strides = [1, 1]} : vector<64x256xf32> to vector<8x256xf32>
    %252 = arith.truncf %250 : vector<8x64xf32> to vector<8x64xbf16>
    %cst_38 = arith.constant dense<0.000000e+00> : vector<8x256xf32>
    %253 = tpu.matmul %252, %208, %cst_38 {dimension_numbers = #tpu.dot_dimension_numbers<[1], [0], [0], [1], [0, 0, 1, 1], [], []>} : vector<8x64xbf16>, vector<64x256xbf16>, vector<8x256xf32> -> vector<8x256xf32>
    %254 = arith.addf %251, %253 : vector<8x256xf32>
    %255 = vector.extract_strided_slice %254 {offsets = [0, 0], sizes = [8, 192], strides = [1, 1]} : vector<8x256xf32> to vector<8x192xf32>
    %256 = arith.negf %255 : vector<8x192xf32>
    %257 = math.exp %256 : vector<8x192xf32>
    %cst_39 = arith.constant 1.000000e+00 : f32
    %258 = vector.broadcast %cst_39 : f32 to vector<8x192xf32>
    %259 = arith.addf %258, %257 : vector<8x192xf32>
    %260 = arith.divf %258, %259 : vector<8x192xf32>
    %261 = vector.extract_strided_slice %254 {offsets = [0, 192], sizes = [8, 64], strides = [1, 1]} : vector<8x256xf32> to vector<8x64xf32>
    %262 = math.tanh %261 : vector<8x64xf32>
    %263 = vector.extract_strided_slice %260 {offsets = [0, 64], sizes = [8, 64], strides = [1, 1]} : vector<8x192xf32> to vector<8x64xf32>
    %264 = arith.mulf %263, %247 : vector<8x64xf32>
    %265 = vector.extract_strided_slice %260 {offsets = [0, 0], sizes = [8, 64], strides = [1, 1]} : vector<8x192xf32> to vector<8x64xf32>
    %266 = arith.mulf %265, %262 : vector<8x64xf32>
    %267 = arith.addf %264, %266 : vector<8x64xf32>
    %268 = vector.extract_strided_slice %260 {offsets = [0, 128], sizes = [8, 64], strides = [1, 1]} : vector<8x192xf32> to vector<8x64xf32>
    %269 = math.tanh %267 : vector<8x64xf32>
    %270 = arith.mulf %268, %269 : vector<8x64xf32>
    %271 = vector.extract_strided_slice %207 {offsets = [24, 0], sizes = [8, 256], strides = [1, 1]} : vector<64x256xf32> to vector<8x256xf32>
    %272 = arith.truncf %270 : vector<8x64xf32> to vector<8x64xbf16>
    %cst_40 = arith.constant dense<0.000000e+00> : vector<8x256xf32>
    %273 = tpu.matmul %272, %208, %cst_40 {dimension_numbers = #tpu.dot_dimension_numbers<[1], [0], [0], [1], [0, 0, 1, 1], [], []>} : vector<8x64xbf16>, vector<64x256xbf16>, vector<8x256xf32> -> vector<8x256xf32>
    %274 = arith.addf %271, %273 : vector<8x256xf32>
    %275 = vector.extract_strided_slice %274 {offsets = [0, 0], sizes = [8, 192], strides = [1, 1]} : vector<8x256xf32> to vector<8x192xf32>
    %276 = arith.negf %275 : vector<8x192xf32>
    %277 = math.exp %276 : vector<8x192xf32>
    %cst_41 = arith.constant 1.000000e+00 : f32
    %278 = vector.broadcast %cst_41 : f32 to vector<8x192xf32>
    %279 = arith.addf %278, %277 : vector<8x192xf32>
    %280 = arith.divf %278, %279 : vector<8x192xf32>
    %281 = vector.extract_strided_slice %274 {offsets = [0, 192], sizes = [8, 64], strides = [1, 1]} : vector<8x256xf32> to vector<8x64xf32>
    %282 = math.tanh %281 : vector<8x64xf32>
    %283 = vector.extract_strided_slice %280 {offsets = [0, 64], sizes = [8, 64], strides = [1, 1]} : vector<8x192xf32> to vector<8x64xf32>
    %284 = arith.mulf %283, %267 : vector<8x64xf32>
    %285 = vector.extract_strided_slice %280 {offsets = [0, 0], sizes = [8, 64], strides = [1, 1]} : vector<8x192xf32> to vector<8x64xf32>
    %286 = arith.mulf %285, %282 : vector<8x64xf32>
    %287 = arith.addf %284, %286 : vector<8x64xf32>
    %288 = vector.extract_strided_slice %280 {offsets = [0, 128], sizes = [8, 64], strides = [1, 1]} : vector<8x192xf32> to vector<8x64xf32>
    %289 = math.tanh %287 : vector<8x64xf32>
    %290 = arith.mulf %288, %289 : vector<8x64xf32>
    %291 = vector.extract_strided_slice %207 {offsets = [32, 0], sizes = [8, 256], strides = [1, 1]} : vector<64x256xf32> to vector<8x256xf32>
    %292 = arith.truncf %290 : vector<8x64xf32> to vector<8x64xbf16>
    %cst_42 = arith.constant dense<0.000000e+00> : vector<8x256xf32>
    %293 = tpu.matmul %292, %208, %cst_42 {dimension_numbers = #tpu.dot_dimension_numbers<[1], [0], [0], [1], [0, 0, 1, 1], [], []>} : vector<8x64xbf16>, vector<64x256xbf16>, vector<8x256xf32> -> vector<8x256xf32>
    %294 = arith.addf %291, %293 : vector<8x256xf32>
    %295 = vector.extract_strided_slice %294 {offsets = [0, 0], sizes = [8, 192], strides = [1, 1]} : vector<8x256xf32> to vector<8x192xf32>
    %296 = arith.negf %295 : vector<8x192xf32>
    %297 = math.exp %296 : vector<8x192xf32>
    %cst_43 = arith.constant 1.000000e+00 : f32
    %298 = vector.broadcast %cst_43 : f32 to vector<8x192xf32>
    %299 = arith.addf %298, %297 : vector<8x192xf32>
    %300 = arith.divf %298, %299 : vector<8x192xf32>
    %301 = vector.extract_strided_slice %294 {offsets = [0, 192], sizes = [8, 64], strides = [1, 1]} : vector<8x256xf32> to vector<8x64xf32>
    %302 = math.tanh %301 : vector<8x64xf32>
    %303 = vector.extract_strided_slice %300 {offsets = [0, 64], sizes = [8, 64], strides = [1, 1]} : vector<8x192xf32> to vector<8x64xf32>
    %304 = arith.mulf %303, %287 : vector<8x64xf32>
    %305 = vector.extract_strided_slice %300 {offsets = [0, 0], sizes = [8, 64], strides = [1, 1]} : vector<8x192xf32> to vector<8x64xf32>
    %306 = arith.mulf %305, %302 : vector<8x64xf32>
    %307 = arith.addf %304, %306 : vector<8x64xf32>
    %308 = vector.extract_strided_slice %300 {offsets = [0, 128], sizes = [8, 64], strides = [1, 1]} : vector<8x192xf32> to vector<8x64xf32>
    %309 = math.tanh %307 : vector<8x64xf32>
    %310 = arith.mulf %308, %309 : vector<8x64xf32>
    %311 = vector.extract_strided_slice %207 {offsets = [40, 0], sizes = [8, 256], strides = [1, 1]} : vector<64x256xf32> to vector<8x256xf32>
    %312 = arith.truncf %310 : vector<8x64xf32> to vector<8x64xbf16>
    %cst_44 = arith.constant dense<0.000000e+00> : vector<8x256xf32>
    %313 = tpu.matmul %312, %208, %cst_44 {dimension_numbers = #tpu.dot_dimension_numbers<[1], [0], [0], [1], [0, 0, 1, 1], [], []>} : vector<8x64xbf16>, vector<64x256xbf16>, vector<8x256xf32> -> vector<8x256xf32>
    %314 = arith.addf %311, %313 : vector<8x256xf32>
    %315 = vector.extract_strided_slice %314 {offsets = [0, 0], sizes = [8, 192], strides = [1, 1]} : vector<8x256xf32> to vector<8x192xf32>
    %316 = arith.negf %315 : vector<8x192xf32>
    %317 = math.exp %316 : vector<8x192xf32>
    %cst_45 = arith.constant 1.000000e+00 : f32
    %318 = vector.broadcast %cst_45 : f32 to vector<8x192xf32>
    %319 = arith.addf %318, %317 : vector<8x192xf32>
    %320 = arith.divf %318, %319 : vector<8x192xf32>
    %321 = vector.extract_strided_slice %314 {offsets = [0, 192], sizes = [8, 64], strides = [1, 1]} : vector<8x256xf32> to vector<8x64xf32>
    %322 = math.tanh %321 : vector<8x64xf32>
    %323 = vector.extract_strided_slice %320 {offsets = [0, 64], sizes = [8, 64], strides = [1, 1]} : vector<8x192xf32> to vector<8x64xf32>
    %324 = arith.mulf %323, %307 : vector<8x64xf32>
    %325 = vector.extract_strided_slice %320 {offsets = [0, 0], sizes = [8, 64], strides = [1, 1]} : vector<8x192xf32> to vector<8x64xf32>
    %326 = arith.mulf %325, %322 : vector<8x64xf32>
    %327 = arith.addf %324, %326 : vector<8x64xf32>
    %328 = vector.extract_strided_slice %320 {offsets = [0, 128], sizes = [8, 64], strides = [1, 1]} : vector<8x192xf32> to vector<8x64xf32>
    %329 = math.tanh %327 : vector<8x64xf32>
    %330 = arith.mulf %328, %329 : vector<8x64xf32>
    %331 = vector.extract_strided_slice %207 {offsets = [48, 0], sizes = [8, 256], strides = [1, 1]} : vector<64x256xf32> to vector<8x256xf32>
    %332 = arith.truncf %330 : vector<8x64xf32> to vector<8x64xbf16>
    %cst_46 = arith.constant dense<0.000000e+00> : vector<8x256xf32>
    %333 = tpu.matmul %332, %208, %cst_46 {dimension_numbers = #tpu.dot_dimension_numbers<[1], [0], [0], [1], [0, 0, 1, 1], [], []>} : vector<8x64xbf16>, vector<64x256xbf16>, vector<8x256xf32> -> vector<8x256xf32>
    %334 = arith.addf %331, %333 : vector<8x256xf32>
    %335 = vector.extract_strided_slice %334 {offsets = [0, 0], sizes = [8, 192], strides = [1, 1]} : vector<8x256xf32> to vector<8x192xf32>
    %336 = arith.negf %335 : vector<8x192xf32>
    %337 = math.exp %336 : vector<8x192xf32>
    %cst_47 = arith.constant 1.000000e+00 : f32
    %338 = vector.broadcast %cst_47 : f32 to vector<8x192xf32>
    %339 = arith.addf %338, %337 : vector<8x192xf32>
    %340 = arith.divf %338, %339 : vector<8x192xf32>
    %341 = vector.extract_strided_slice %334 {offsets = [0, 192], sizes = [8, 64], strides = [1, 1]} : vector<8x256xf32> to vector<8x64xf32>
    %342 = math.tanh %341 : vector<8x64xf32>
    %343 = vector.extract_strided_slice %340 {offsets = [0, 64], sizes = [8, 64], strides = [1, 1]} : vector<8x192xf32> to vector<8x64xf32>
    %344 = arith.mulf %343, %327 : vector<8x64xf32>
    %345 = vector.extract_strided_slice %340 {offsets = [0, 0], sizes = [8, 64], strides = [1, 1]} : vector<8x192xf32> to vector<8x64xf32>
    %346 = arith.mulf %345, %342 : vector<8x64xf32>
    %347 = arith.addf %344, %346 : vector<8x64xf32>
    %348 = vector.extract_strided_slice %340 {offsets = [0, 128], sizes = [8, 64], strides = [1, 1]} : vector<8x192xf32> to vector<8x64xf32>
    %349 = math.tanh %347 : vector<8x64xf32>
    %350 = arith.mulf %348, %349 : vector<8x64xf32>
    %351 = vector.extract_strided_slice %207 {offsets = [56, 0], sizes = [8, 256], strides = [1, 1]} : vector<64x256xf32> to vector<8x256xf32>
    %352 = arith.truncf %350 : vector<8x64xf32> to vector<8x64xbf16>
    %cst_48 = arith.constant dense<0.000000e+00> : vector<8x256xf32>
    %353 = tpu.matmul %352, %208, %cst_48 {dimension_numbers = #tpu.dot_dimension_numbers<[1], [0], [0], [1], [0, 0, 1, 1], [], []>} : vector<8x64xbf16>, vector<64x256xbf16>, vector<8x256xf32> -> vector<8x256xf32>
    %354 = arith.addf %351, %353 : vector<8x256xf32>
    %355 = vector.extract_strided_slice %354 {offsets = [0, 0], sizes = [8, 192], strides = [1, 1]} : vector<8x256xf32> to vector<8x192xf32>
    %356 = arith.negf %355 : vector<8x192xf32>
    %357 = math.exp %356 : vector<8x192xf32>
    %cst_49 = arith.constant 1.000000e+00 : f32
    %358 = vector.broadcast %cst_49 : f32 to vector<8x192xf32>
    %359 = arith.addf %358, %357 : vector<8x192xf32>
    %360 = arith.divf %358, %359 : vector<8x192xf32>
    %361 = vector.extract_strided_slice %354 {offsets = [0, 192], sizes = [8, 64], strides = [1, 1]} : vector<8x256xf32> to vector<8x64xf32>
    %362 = math.tanh %361 : vector<8x64xf32>
    %363 = vector.extract_strided_slice %360 {offsets = [0, 64], sizes = [8, 64], strides = [1, 1]} : vector<8x192xf32> to vector<8x64xf32>
    %364 = arith.mulf %363, %347 : vector<8x64xf32>
    %365 = vector.extract_strided_slice %360 {offsets = [0, 0], sizes = [8, 64], strides = [1, 1]} : vector<8x192xf32> to vector<8x64xf32>
    %366 = arith.mulf %365, %362 : vector<8x64xf32>
    %367 = arith.addf %364, %366 : vector<8x64xf32>
    %368 = vector.extract_strided_slice %360 {offsets = [0, 128], sizes = [8, 64], strides = [1, 1]} : vector<8x192xf32> to vector<8x64xf32>
    %369 = math.tanh %367 : vector<8x64xf32>
    %370 = arith.mulf %368, %369 : vector<8x64xf32>
    %371 = vector.extract_strided_slice %230 {offsets = [0, 0], sizes = [8, 32], strides = [1, 1]} : vector<8x64xf32> to vector<8x32xf32>
    %372 = vector.extract_strided_slice %370 {offsets = [0, 32], sizes = [8, 32], strides = [1, 1]} : vector<8x64xf32> to vector<8x32xf32>
    %373 = tpu.concatenate %371, %372 in 1 : vector<8x32xf32>, vector<8x32xf32> -> vector<8x64xf32>
    %374 = vector.extract_strided_slice %250 {offsets = [0, 0], sizes = [8, 32], strides = [1, 1]} : vector<8x64xf32> to vector<8x32xf32>
    %375 = vector.extract_strided_slice %350 {offsets = [0, 32], sizes = [8, 32], strides = [1, 1]} : vector<8x64xf32> to vector<8x32xf32>
    %376 = tpu.concatenate %374, %375 in 1 : vector<8x32xf32>, vector<8x32xf32> -> vector<8x64xf32>
    %377 = vector.extract_strided_slice %270 {offsets = [0, 0], sizes = [8, 32], strides = [1, 1]} : vector<8x64xf32> to vector<8x32xf32>
    %378 = vector.extract_strided_slice %330 {offsets = [0, 32], sizes = [8, 32], strides = [1, 1]} : vector<8x64xf32> to vector<8x32xf32>
    %379 = tpu.concatenate %377, %378 in 1 : vector<8x32xf32>, vector<8x32xf32> -> vector<8x64xf32>
    %380 = vector.extract_strided_slice %290 {offsets = [0, 0], sizes = [8, 32], strides = [1, 1]} : vector<8x64xf32> to vector<8x32xf32>
    %381 = vector.extract_strided_slice %310 {offsets = [0, 32], sizes = [8, 32], strides = [1, 1]} : vector<8x64xf32> to vector<8x32xf32>
    %382 = tpu.concatenate %380, %381 in 1 : vector<8x32xf32>, vector<8x32xf32> -> vector<8x64xf32>
    %383 = vector.extract_strided_slice %310 {offsets = [0, 0], sizes = [8, 32], strides = [1, 1]} : vector<8x64xf32> to vector<8x32xf32>
    %384 = vector.extract_strided_slice %290 {offsets = [0, 32], sizes = [8, 32], strides = [1, 1]} : vector<8x64xf32> to vector<8x32xf32>
    %385 = tpu.concatenate %383, %384 in 1 : vector<8x32xf32>, vector<8x32xf32> -> vector<8x64xf32>
    %386 = vector.extract_strided_slice %330 {offsets = [0, 0], sizes = [8, 32], strides = [1, 1]} : vector<8x64xf32> to vector<8x32xf32>
    %387 = vector.extract_strided_slice %270 {offsets = [0, 32], sizes = [8, 32], strides = [1, 1]} : vector<8x64xf32> to vector<8x32xf32>
    %388 = tpu.concatenate %386, %387 in 1 : vector<8x32xf32>, vector<8x32xf32> -> vector<8x64xf32>
    %389 = vector.extract_strided_slice %350 {offsets = [0, 0], sizes = [8, 32], strides = [1, 1]} : vector<8x64xf32> to vector<8x32xf32>
    %390 = vector.extract_strided_slice %250 {offsets = [0, 32], sizes = [8, 32], strides = [1, 1]} : vector<8x64xf32> to vector<8x32xf32>
    %391 = tpu.concatenate %389, %390 in 1 : vector<8x32xf32>, vector<8x32xf32> -> vector<8x64xf32>
    %392 = vector.extract_strided_slice %370 {offsets = [0, 0], sizes = [8, 32], strides = [1, 1]} : vector<8x64xf32> to vector<8x32xf32>
    %393 = vector.extract_strided_slice %230 {offsets = [0, 32], sizes = [8, 32], strides = [1, 1]} : vector<8x64xf32> to vector<8x32xf32>
    %394 = tpu.concatenate %392, %393 in 1 : vector<8x32xf32>, vector<8x32xf32> -> vector<8x64xf32>
    %395 = tpu.concatenate %373, %376, %379, %382, %385, %388, %391, %394 in 0 : vector<8x64xf32>, vector<8x64xf32>, vector<8x64xf32>, vector<8x64xf32>, vector<8x64xf32>, vector<8x64xf32>, vector<8x64xf32>, vector<8x64xf32> -> vector<64x64xf32>
    %c0_50 = arith.constant 0 : index
    %c0_51 = arith.constant 0 : index
    %396 = vector.load %arg7[%c0_50, %c0_51] : memref<64x32xbf16, #tpu.memory_space<vmem>>, vector<64x32xbf16>
    %c0_52 = arith.constant 0 : index
    %c0_53 = arith.constant 0 : index
    %397 = vector.load %arg8[%c0_52, %c0_53] : memref<1x32xf32, #tpu.memory_space<vmem>>, vector<1x32xf32>
    %398 = arith.truncf %395 : vector<64x64xf32> to vector<64x64xbf16>
    %cst_54 = arith.constant dense<0.000000e+00> : vector<64x32xf32>
    %399 = tpu.matmul %398, %396, %cst_54 {dimension_numbers = #tpu.dot_dimension_numbers<[1], [0], [0], [1], [0, 0, 1, 1], [], []>} : vector<64x64xbf16>, vector<64x32xbf16>, vector<64x32xf32> -> vector<64x32xf32>
    %400 = vector.broadcast %397 : vector<1x32xf32> to vector<64x32xf32>
    %401 = arith.addf %399, %400 : vector<64x32xf32>
    %402 = math.tanh %401 : vector<64x32xf32>
    %c0_55 = arith.constant 0 : index
    %c0_56 = arith.constant 0 : index
    %403 = vector.load %arg9[%c0_55, %c0_56] : memref<32x1xbf16, #tpu.memory_space<vmem>>, vector<32x1xbf16>
    %c0_57 = arith.constant 0 : index
    %c0_58 = arith.constant 0 : index
    %404 = vector.load %arg10[%c0_57, %c0_58] : memref<1x1xf32, #tpu.memory_space<vmem>>, vector<1x1xf32>
    %405 = arith.truncf %402 : vector<64x32xf32> to vector<64x32xbf16>
    %cst_59 = arith.constant dense<0.000000e+00> : vector<64x1xf32>
    %406 = tpu.matmul %405, %403, %cst_59 {dimension_numbers = #tpu.dot_dimension_numbers<[1], [0], [0], [1], [0, 0, 1, 1], [], []>} : vector<64x32xbf16>, vector<32x1xbf16>, vector<64x1xf32> -> vector<64x1xf32>
    %407 = vector.broadcast %404 : vector<1x1xf32> to vector<64x1xf32>
    %408 = arith.addf %406, %407 : vector<64x1xf32>
    %409 = vector.extract_strided_slice %408 {offsets = [0, 0], sizes = [8, 1], strides = [1, 1]} : vector<64x1xf32> to vector<8x1xf32>
    %410 = vector.extract_strided_slice %408 {offsets = [8, 0], sizes = [8, 1], strides = [1, 1]} : vector<64x1xf32> to vector<8x1xf32>
    %411 = vector.extract_strided_slice %408 {offsets = [16, 0], sizes = [8, 1], strides = [1, 1]} : vector<64x1xf32> to vector<8x1xf32>
    %412 = vector.extract_strided_slice %408 {offsets = [24, 0], sizes = [8, 1], strides = [1, 1]} : vector<64x1xf32> to vector<8x1xf32>
    %413 = vector.extract_strided_slice %408 {offsets = [32, 0], sizes = [8, 1], strides = [1, 1]} : vector<64x1xf32> to vector<8x1xf32>
    %414 = vector.extract_strided_slice %408 {offsets = [40, 0], sizes = [8, 1], strides = [1, 1]} : vector<64x1xf32> to vector<8x1xf32>
    %415 = vector.extract_strided_slice %408 {offsets = [48, 0], sizes = [8, 1], strides = [1, 1]} : vector<64x1xf32> to vector<8x1xf32>
    %416 = vector.extract_strided_slice %408 {offsets = [56, 0], sizes = [8, 1], strides = [1, 1]} : vector<64x1xf32> to vector<8x1xf32>
    %417 = tpu.concatenate %409, %410, %411, %412, %413, %414, %415, %416 in 1 : vector<8x1xf32>, vector<8x1xf32>, vector<8x1xf32>, vector<8x1xf32>, vector<8x1xf32>, vector<8x1xf32>, vector<8x1xf32>, vector<8x1xf32> -> vector<8x8xf32>
    %cst_60 = arith.constant dense<0xFF800000> : vector<8xf32>
    %418 = vector.multi_reduction <maximumf>, %417, %cst_60 [1] : vector<8x8xf32> to vector<8xf32>
    %419 = vector.shape_cast %418 : vector<8xf32> to vector<8x1xf32>
    %420 = vector.broadcast %419 : vector<8x1xf32> to vector<8x8xf32>
    %421 = arith.subf %417, %420 : vector<8x8xf32>
    %422 = math.exp %421 : vector<8x8xf32>
    %cst_61 = arith.constant dense<0.000000e+00> : vector<8xf32>
    %423 = vector.multi_reduction <add>, %422, %cst_61 [1] : vector<8x8xf32> to vector<8xf32>
    %424 = vector.shape_cast %423 : vector<8xf32> to vector<8x1xf32>
    %425 = tpu.reciprocal %424 {approx = true} : vector<8x1xf32> -> vector<8x1xf32>
    %426 = vector.broadcast %425 : vector<8x1xf32> to vector<8x8xf32>
    %427 = arith.mulf %422, %426 : vector<8x8xf32>
    %428 = vector.extract_strided_slice %427 {offsets = [0, 0], sizes = [8, 1], strides = [1, 1]} : vector<8x8xf32> to vector<8x1xf32>
    %429 = vector.broadcast %428 : vector<8x1xf32> to vector<8x64xf32>
    %430 = arith.mulf %429, %373 : vector<8x64xf32>
    %431 = vector.extract_strided_slice %427 {offsets = [0, 1], sizes = [8, 1], strides = [1, 1]} : vector<8x8xf32> to vector<8x1xf32>
    %432 = vector.broadcast %431 : vector<8x1xf32> to vector<8x64xf32>
    %433 = arith.mulf %432, %376 : vector<8x64xf32>
    %434 = arith.addf %430, %433 : vector<8x64xf32>
    %435 = vector.extract_strided_slice %427 {offsets = [0, 2], sizes = [8, 1], strides = [1, 1]} : vector<8x8xf32> to vector<8x1xf32>
    %436 = vector.broadcast %435 : vector<8x1xf32> to vector<8x64xf32>
    %437 = arith.mulf %436, %379 : vector<8x64xf32>
    %438 = arith.addf %434, %437 : vector<8x64xf32>
    %439 = vector.extract_strided_slice %427 {offsets = [0, 3], sizes = [8, 1], strides = [1, 1]} : vector<8x8xf32> to vector<8x1xf32>
    %440 = vector.broadcast %439 : vector<8x1xf32> to vector<8x64xf32>
    %441 = arith.mulf %440, %382 : vector<8x64xf32>
    %442 = arith.addf %438, %441 : vector<8x64xf32>
    %443 = vector.extract_strided_slice %427 {offsets = [0, 4], sizes = [8, 1], strides = [1, 1]} : vector<8x8xf32> to vector<8x1xf32>
    %444 = vector.broadcast %443 : vector<8x1xf32> to vector<8x64xf32>
    %445 = arith.mulf %444, %385 : vector<8x64xf32>
    %446 = arith.addf %442, %445 : vector<8x64xf32>
    %447 = vector.extract_strided_slice %427 {offsets = [0, 5], sizes = [8, 1], strides = [1, 1]} : vector<8x8xf32> to vector<8x1xf32>
    %448 = vector.broadcast %447 : vector<8x1xf32> to vector<8x64xf32>
    %449 = arith.mulf %448, %388 : vector<8x64xf32>
    %450 = arith.addf %446, %449 : vector<8x64xf32>
    %451 = vector.extract_strided_slice %427 {offsets = [0, 6], sizes = [8, 1], strides = [1, 1]} : vector<8x8xf32> to vector<8x1xf32>
    %452 = vector.broadcast %451 : vector<8x1xf32> to vector<8x64xf32>
    %453 = arith.mulf %452, %391 : vector<8x64xf32>
    %454 = arith.addf %450, %453 : vector<8x64xf32>
    %455 = vector.extract_strided_slice %427 {offsets = [0, 7], sizes = [8, 1], strides = [1, 1]} : vector<8x8xf32> to vector<8x1xf32>
    %456 = vector.broadcast %455 : vector<8x1xf32> to vector<8x64xf32>
    %457 = arith.mulf %456, %394 : vector<8x64xf32>
    %458 = arith.addf %454, %457 : vector<8x64xf32>
    %c0_62 = arith.constant 0 : index
    %c0_63 = arith.constant 0 : index
    %459 = vector.load %arg11[%c0_62, %c0_63] : memref<64x96xbf16, #tpu.memory_space<vmem>>, vector<64x96xbf16>
    %c0_64 = arith.constant 0 : index
    %c0_65 = arith.constant 0 : index
    %460 = vector.load %arg12[%c0_64, %c0_65] : memref<1x96xf32, #tpu.memory_space<vmem>>, vector<1x96xf32>
    %461 = arith.truncf %458 : vector<8x64xf32> to vector<8x64xbf16>
    %cst_66 = arith.constant dense<0.000000e+00> : vector<8x96xf32>
    %462 = tpu.matmul %461, %459, %cst_66 {dimension_numbers = #tpu.dot_dimension_numbers<[1], [0], [0], [1], [0, 0, 1, 1], [], []>} : vector<8x64xbf16>, vector<64x96xbf16>, vector<8x96xf32> -> vector<8x96xf32>
    %463 = vector.broadcast %460 : vector<1x96xf32> to vector<8x96xf32>
    %464 = arith.addf %462, %463 : vector<8x96xf32>
    %cst_67 = arith.constant 0.000000e+00 : f32
    %465 = vector.broadcast %cst_67 : f32 to vector<8x96xf32>
    %466 = arith.maximumf %464, %465 : vector<8x96xf32>
    %c0_68 = arith.constant 0 : index
    %c0_69 = arith.constant 0 : index
    %467 = vector.load %arg13[%c0_68, %c0_69] : memref<96x5xbf16, #tpu.memory_space<vmem>>, vector<96x5xbf16>
    %c0_70 = arith.constant 0 : index
    %c0_71 = arith.constant 0 : index
    %468 = vector.load %arg14[%c0_70, %c0_71] : memref<1x5xf32, #tpu.memory_space<vmem>>, vector<1x5xf32>
    %469 = arith.truncf %466 : vector<8x96xf32> to vector<8x96xbf16>
    %cst_72 = arith.constant dense<0.000000e+00> : vector<8x5xf32>
    %470 = tpu.matmul %469, %467, %cst_72 {dimension_numbers = #tpu.dot_dimension_numbers<[1], [0], [0], [1], [0, 0, 1, 1], [], []>} : vector<8x96xbf16>, vector<96x5xbf16>, vector<8x5xf32> -> vector<8x5xf32>
    %471 = vector.broadcast %468 : vector<1x5xf32> to vector<8x5xf32>
    %472 = arith.addf %470, %471 : vector<8x5xf32>
    %473 = vector.extract_strided_slice %472 {offsets = [0, 0], sizes = [8, 4], strides = [1, 1]} : vector<8x5xf32> to vector<8x4xf32>
    %474 = vector.extract_strided_slice %472 {offsets = [0, 4], sizes = [8, 1], strides = [1, 1]} : vector<8x5xf32> to vector<8x1xf32>
    %475 = arith.negf %474 : vector<8x1xf32>
    %476 = math.exp %475 : vector<8x1xf32>
    %cst_73 = arith.constant 1.000000e+00 : f32
    %477 = vector.broadcast %cst_73 : f32 to vector<8x1xf32>
    %478 = arith.addf %477, %476 : vector<8x1xf32>
    %479 = arith.divf %477, %478 : vector<8x1xf32>
    %480 = tpu.concatenate %473, %479 in 1 : vector<8x4xf32>, vector<8x1xf32> -> vector<8x5xf32>
    %c0_74 = arith.constant 0 : index
    %c0_75 = arith.constant 0 : index
    %481 = vector.load %arg15[%c0_74, %c0_75] : memref<8x5xf32, #tpu.memory_space<vmem>>, vector<8x5xf32>
    tpu.vector_store %arg15[%c0_74, %c0_75], %480 {strides = array<i32>} : memref<8x5xf32, #tpu.memory_space<vmem>>, vector<8x5xf32>,
    return
  }
}

</mosaic_0001>

<llo_original>
// kernel: forward.1
$region0: #{forward.1}
  #allocation0 [shape = 'u32[]', space=smem, size = 0x4, offset = 0x4, fixed_abs, tag = 'smem constant byte address 0x4 - core index']
  #allocation1 [shape = 'u32[144,128]{1,0:T(1,128)}', space=vmem, size = 0x12000, scoped, tag = 'internal scratch']
  #allocation2 [shape = 'f32[1,1]{1,0:T(1,128)S(1)}', space=vmem, size = 0x200, scoped, tag = 'scoped memory for forward.1']
  %s0 = inlined_call_operand.vmem [shape: bf16[64,32], index: 0, kind: input, shape index: {}]
  %s1 = inlined_call_operand.vmem [shape: bf16[32,256], index: 1, kind: input, shape index: {}]
  %s2 = inlined_call_operand.vmem [shape: bf16[64,256], index: 2, kind: input, shape index: {}]
  %s3 = inlined_call_operand.vmem [shape: f32[1,256], index: 3, kind: input, shape index: {}]
  %s4 = inlined_call_operand.vmem [shape: bf16[128,256], index: 4, kind: input, shape index: {}]
  %s5 = inlined_call_operand.vmem [shape: bf16[64,256], index: 5, kind: input, shape index: {}]
  %s6 = inlined_call_operand.vmem [shape: f32[1,256], index: 6, kind: input, shape index: {}]
  %s7 = inlined_call_operand.vmem [shape: bf16[64,32], index: 7, kind: input, shape index: {}]
  %s8 = inlined_call_operand.vmem [shape: f32[1,32], index: 8, kind: input, shape index: {}]
  %s9 = inlined_call_operand.vmem [shape: bf16[32,1], index: 9, kind: input, shape index: {}]
  %s10 = inlined_call_operand.<no memory space> [shape: f32[1,1], index: 10, kind: input, shape index: {}]
  %s11 = inlined_call_operand.vmem [shape: bf16[64,96], index: 11, kind: input, shape index: {}]
  %s12 = inlined_call_operand.vmem [shape: f32[1,96], index: 12, kind: input, shape index: {}]
  %s13 = inlined_call_operand.vmem [shape: bf16[96,5], index: 13, kind: input, shape index: {}]
  %s14 = inlined_call_operand.vmem [shape: f32[1,5], index: 14, kind: input, shape index: {}]
  %s15 = inlined_call_operand.vmem [shape: f32[8,5], index: 15, kind: output, shape index: {}]
  %s16 = sld [smem:[#allocation0]]
  $region70: #{forward.1} parent=0
    _
  %s18 = ssub.s32 1, %s16
  %s19 = scalar_select 0, %s18, %s16
  %v20 = vstv %s10
  %21 = vst [vmem:[#allocation2] sm:$0x1] %v20
  // Predicated region
  $region2: #{forward.1} parent=0 // pred_check
    _
  $region3: #{forward.1} parent=0 // pred_check_branch
    %23 = sbr.rel (0) target = $region5
  $region4: #{forward.1} parent=0 // pred_region
    _
  $region5: #{forward.1} parent=0 // pred_fallthru
    _
  // Predicated region
  $region6: #{forward.1} parent=0 // pred_check
    _
  $region7: #{forward.1} parent=0 // pred_check_branch
    %25 = sbr.rel (0) target = $region9
  $region8: #{forward.1} parent=0 // pred_region
    _
  $region9: #{forward.1} parent=0 // pred_fallthru
    _
  // Predicated region
  $region10: #{forward.1} parent=0 // pred_check
    _
  $region11: #{forward.1} parent=0 // pred_check_branch
    %27 = sbr.rel (0) target = $region13
  $region12: #{forward.1} parent=0 // pred_region
    _
  $region13: #{forward.1} parent=0 // pred_fallthru
    _
  // Predicated region
  $region14: #{forward.1} parent=0 // pred_check
    _
  $region15: #{forward.1} parent=0 // pred_check_branch
    %29 = sbr.rel (0) target = $region17
  $region16: #{forward.1} parent=0 // pred_region
    _
  $region17: #{forward.1} parent=0 // pred_fallthru
    _
  // Predicated region
  $region18: #{forward.1} parent=0 // pred_check
    _
  $region19: #{forward.1} parent=0 // pred_check_branch
    %31 = sbr.rel (0) target = $region21
  $region20: #{forward.1} parent=0 // pred_region
    _
  $region21: #{forward.1} parent=0 // pred_fallthru
    _
  // Predicated region
  $region22: #{forward.1} parent=0 // pred_check
    _
  $region23: #{forward.1} parent=0 // pred_check_branch
    %33 = sbr.rel (0) target = $region25
  $region24: #{forward.1} parent=0 // pred_region
    _
  $region25: #{forward.1} parent=0 // pred_fallthru
    _
  // Predicated region
  $region26: #{forward.1} parent=0 // pred_check
    _
  $region27: #{forward.1} parent=0 // pred_check_branch
    %35 = sbr.rel (0) target = $region29
  $region28: #{forward.1} parent=0 // pred_region
    _
  $region29: #{forward.1} parent=0 // pred_fallthru
    _
  // Predicated region
  $region30: #{forward.1} parent=0 // pred_check
    _
  $region31: #{forward.1} parent=0 // pred_check_branch
    %37 = sbr.rel (0) target = $region33
  $region32: #{forward.1} parent=0 // pred_region
    _
  $region33: #{forward.1} parent=0 // pred_fallthru
    _
  // Predicated region
  $region34: #{forward.1} parent=0 // pred_check
    _
  $region35: #{forward.1} parent=0 // pred_check_branch
    %39 = sbr.rel (0) target = $region37
  $region36: #{forward.1} parent=0 // pred_region
    _
  $region37: #{forward.1} parent=0 // pred_fallthru
    _
  // Predicated region
  $region38: #{forward.1} parent=0 // pred_check
    _
  $region39: #{forward.1} parent=0 // pred_check_branch
    %41 = sbr.rel (0) target = $region41
  $region40: #{forward.1} parent=0 // pred_region
    _
  $region41: #{forward.1} parent=0 // pred_fallthru
    _
  // Predicated region
  $region42: #{forward.1} parent=0 // pred_check
    _
  $region43: #{forward.1} parent=0 // pred_check_branch
    %43 = sbr.rel (0) target = $region45
  $region44: #{forward.1} parent=0 // pred_region
    _
  $region45: #{forward.1} parent=0 // pred_fallthru
    _
  // Predicated region
  $region46: #{forward.1} parent=0 // pred_check
    _
  $region47: #{forward.1} parent=0 // pred_check_branch
    %45 = sbr.rel (0) target = $region49
  $region48: #{forward.1} parent=0 // pred_region
    _
  $region49: #{forward.1} parent=0 // pred_fallthru
    _
  // Predicated region
  $region50: #{forward.1} parent=0 // pred_check
    _
  $region51: #{forward.1} parent=0 // pred_check_branch
    %47 = sbr.rel (0) target = $region53
  $region52: #{forward.1} parent=0 // pred_region
    _
  $region53: #{forward.1} parent=0 // pred_fallthru
    _
  // Predicated region
  $region54: #{forward.1} parent=0 // pred_check
    _
  $region55: #{forward.1} parent=0 // pred_check_branch
    %49 = sbr.rel (0) target = $region57
  $region56: #{forward.1} parent=0 // pred_region
    _
  $region57: #{forward.1} parent=0 // pred_fallthru
    _
  // Predicated region
  $region58: #{forward.1} parent=0 // pred_check
    _
  $region59: #{forward.1} parent=0 // pred_check_branch
    %51 = sbr.rel (0) target = $region61
  $region60: #{forward.1} parent=0 // pred_region
    _
  $region61: #{forward.1} parent=0 // pred_fallthru
    _
  %v53 = vld [vmem:[%s0] sm:$0xf]
  %v54 = vld [vmem:[%s0 + $0x4] sm:$0xf]
  %v55 = vld [vmem:[%s0 + $0x8] sm:$0xf]
  %v56 = vld [vmem:[%s0 + $0xc] sm:$0xf]
  %v57 = vld [vmem:[%s0 + $0x10] sm:$0xf]
  %v58 = vld [vmem:[%s0 + $0x14] sm:$0xf]
  %v59 = vld [vmem:[%s0 + $0x18] sm:$0xf]
  %v60 = vld [vmem:[%s0 + $0x1c] sm:$0xf]
  %v61 = vld [vmem:[%s1] sm:$0xff]
  %v62 = vld [vmem:[%s1 + $0x8] sm:$0xff]
  %v63 = vld [vmem:[%s1 + $0x10] sm:$0xff]
  %v64 = vld [vmem:[%s1 + $0x18] sm:$0xff]
  %v65 = vld [vmem:[%s3] sm:$0x3]
  %v67 = vlaneseq
  %v68 = vshrl.u32 %v67, 7
  %v69 = vsub.s32 0, %v68
  %v70 = vrot.slane %v65, %v69
  %v71 = vlaneseq
  %v72 = vshrl.u32 %v71, 7
  %v73 = vsub.s32 1, %v72
  %v74 = vrot.slane %v65, %v73
  %v85 = vunpack.c.l.b16 %v53
  %v86 = vunpack.c.l.b16 %v54
  %v87 = vunpack.c.l.b16 %v55
  %v88 = vunpack.c.l.b16 %v56
  %v89 = vunpack.c.l.b16 %v57
  %v90 = vunpack.c.l.b16 %v58
  %v91 = vunpack.c.l.b16 %v59
  %v92 = vunpack.c.l.b16 %v60
  %v93 = vpack.c.b16 %v86, %v85
  %v94 = vpack.c.b16 %v88, %v87
  %v95 = vpack.c.b16 %v90, %v89
  %v96 = vpack.c.b16 %v92, %v91
  %v101 = vunpack.c.l.b16 %v61
  %v102 = vunpack.c.h.b16 %v61
  %v103 = vunpack.c.l.b16 %v62
  %v104 = vunpack.c.h.b16 %v62
  %v105 = vunpack.c.l.b16 %v63
  %v106 = vunpack.c.h.b16 %v63
  %v107 = vunpack.c.l.b16 %v64
  %v108 = vunpack.c.h.b16 %v64
  %v109 = vpack.c.b16 %v103, %v101
  %v110 = vpack.c.b16 %v104, %v102
  %v111 = vpack.c.b16 %v107, %v105
  %v112 = vpack.c.b16 %v108, %v106
  %vm117 = vcmask 261120
  %v119 = vsel %vm117, %v93, 0
  %v122 = vsel %vm117, %v94, 0
  %v125 = vsel %vm117, %v95, 0
  %v128 = vsel %vm117, %v96, 0
  %130 = vmatprep.subr.bf16.mxu0 0
  %131 = vmatpush1.bf16.msra.mxu0 0
  %132 = vmatprep.subr.bf16.mxu0 0
  %133 = vmatpush1.bf16.msra.mxu0 0
  %134 = vmatprep.subr.bf16.mxu0 0
  %135 = vmatpush1.bf16.msra.mxu0 0
  %136 = vmatprep.subr.bf16.mxu0 0
  %137 = vmatpush1.bf16.msra.mxu0 0
  %138 = vmatprep.subr.bf16.mxu0 0
  %139 = vmatpush1.bf16.msra.mxu0 0
  %140 = vmatprep.subr.bf16.mxu0 0
  %141 = vmatpush1.bf16.msra.mxu0 0
  %142 = vmatprep.subr.bf16.mxu0 %v112
  %143 = vmatpush1.bf16.msra.mxu0 %v111
  %144 = vmatprep.subr.bf16.mxu0 %v110
  %145 = vmatpush1.bf16.msra.mxu0 %v109
  %146 = vmatprep.subr.bf16.mxu0 0
  %147 = vmatpush2.bf16.msra.mxu0 0
  %148 = vmatprep.subr.bf16.mxu0 0
  %149 = vmatpush2.bf16.msra.mxu0 0
  %150 = vmatprep.subr.bf16.mxu0 0
  %151 = vmatpush2.bf16.msra.mxu0 0
  %152 = vmatprep.subr.bf16.mxu0 0
  %153 = vmatpush2.bf16.msra.mxu0 0
  %154 = vmatprep.subr.bf16.mxu0 0
  %155 = vmatpush2.bf16.msra.mxu0 0
  %156 = vmatprep.subr.bf16.mxu0 0
  %157 = vmatpush2.bf16.msra.mxu0 0
  %158 = vmatprep.subr.bf16.mxu0 0
  %159 = vmatpush2.bf16.msra.mxu0 0
  %160 = vmatprep.subr.bf16.mxu0 0
  %161 = vmatpush2.bf16.msra.mxu0 0
  %162 = vmatprep.mubr.bf16.mxu0 0
  %163 = vmatmul.mubr.bf16.gmra.mxu0 %v119
  %v164 = vpop.f32.mrf.mxu0
  %v165 = vadd.f32 %v70, %v164
  %v166 = vpop.f32.mrf.mxu0
  %v167 = vadd.f32 %v74, %v166
  %v168 = vpop.f32.mrf.mxu0
  %v169 = vadd.f32 %v70, %v168
  %v170 = vpop.f32.mrf.mxu0
  %v171 = vadd.f32 %v74, %v170
  %172 = vmatprep.mubr.bf16.mxu0 0
  %173 = vmatmul.mubr.bf16.gmra.mxu0 %v122
  %v174 = vpop.f32.mrf.mxu0
  %v175 = vadd.f32 %v70, %v174
  %v176 = vpop.f32.mrf.mxu0
  %v177 = vadd.f32 %v74, %v176
  %v178 = vpop.f32.mrf.mxu0
  %v179 = vadd.f32 %v70, %v178
  %v180 = vpop.f32.mrf.mxu0
  %v181 = vadd.f32 %v74, %v180
  %182 = vmatprep.mubr.bf16.mxu0 0
  %183 = vmatmul.mubr.bf16.gmra.mxu0 %v125
  %v184 = vpop.f32.mrf.mxu0
  %v185 = vadd.f32 %v70, %v184
  %v186 = vpop.f32.mrf.mxu0
  %v187 = vadd.f32 %v74, %v186
  %v188 = vpop.f32.mrf.mxu0
  %v189 = vadd.f32 %v70, %v188
  %v190 = vpop.f32.mrf.mxu0
  %v191 = vadd.f32 %v74, %v190
  %192 = vmatprep.mubr.bf16.mxu0 0
  %193 = vmatmul.mubr.bf16.gmra.mxu0 %v128
  %v194 = vpop.f32.mrf.mxu0
  %v195 = vadd.f32 %v70, %v194
  %v196 = vpop.f32.mrf.mxu0
  %v197 = vadd.f32 %v74, %v196
  %v198 = vpop.f32.mrf.mxu0
  %v199 = vadd.f32 %v70, %v198
  %v200 = vpop.f32.mrf.mxu0
  %v201 = vadd.f32 %v74, %v200
  %202 = vdwg.mxu0
  %v203 = vld [vmem:[%s2] sm:$0xff]
  %v204 = vld [vmem:[%s2 + $0x8] sm:$0xff]
  %v205 = vld [vmem:[%s2 + $0x10] sm:$0xff]
  %v206 = vld [vmem:[%s2 + $0x18] sm:$0xff]
  %v207 = vld [vmem:[%s2 + $0x20] sm:$0xff]
  %v208 = vld [vmem:[%s2 + $0x28] sm:$0xff]
  %v209 = vld [vmem:[%s2 + $0x30] sm:$0xff]
  %v210 = vld [vmem:[%s2 + $0x38] sm:$0xff]
  %v219 = vunpack.c.l.b16 %v203
  %v220 = vunpack.c.h.b16 %v203
  %v221 = vunpack.c.l.b16 %v204
  %v222 = vunpack.c.h.b16 %v204
  %v223 = vunpack.c.l.b16 %v205
  %v224 = vunpack.c.h.b16 %v205
  %v225 = vunpack.c.l.b16 %v206
  %v226 = vunpack.c.h.b16 %v206
  %v227 = vunpack.c.l.b16 %v207
  %v228 = vunpack.c.h.b16 %v207
  %v229 = vunpack.c.l.b16 %v208
  %v230 = vunpack.c.h.b16 %v208
  %v231 = vunpack.c.l.b16 %v209
  %v232 = vunpack.c.h.b16 %v209
  %v233 = vunpack.c.l.b16 %v210
  %v234 = vunpack.c.h.b16 %v210
  %v235 = vpack.c.b16 %v221, %v219
  %v236 = vpack.c.b16 %v222, %v220
  %v237 = vpack.c.b16 %v225, %v223
  %v238 = vpack.c.b16 %v226, %v224
  %v239 = vpack.c.b16 %v229, %v227
  %v240 = vpack.c.b16 %v230, %v228
  %v241 = vpack.c.b16 %v233, %v231
  %v242 = vpack.c.b16 %v234, %v232
  %vm251 = vcmask 523264
  %v253 = vsel %vm251, 0, 0
  %255 = vmatprep.subr.bf16.mxu0 0
  %256 = vmatpush1.bf16.msra.mxu0 0
  %257 = vmatprep.subr.bf16.mxu0 0
  %258 = vmatpush1.bf16.msra.mxu0 0
  %259 = vmatprep.subr.bf16.mxu0 0
  %260 = vmatpush1.bf16.msra.mxu0 0
  %261 = vmatprep.subr.bf16.mxu0 0
  %262 = vmatpush1.bf16.msra.mxu0 0
  %263 = vmatprep.subr.bf16.mxu0 %v242
  %264 = vmatpush1.bf16.msra.mxu0 %v241
  %265 = vmatprep.subr.bf16.mxu0 %v240
  %266 = vmatpush1.bf16.msra.mxu0 %v239
  %267 = vmatprep.subr.bf16.mxu0 %v238
  %268 = vmatpush1.bf16.msra.mxu0 %v237
  %269 = vmatprep.subr.bf16.mxu0 %v236
  %270 = vmatpush1.bf16.msra.mxu0 %v235
  %271 = vmatprep.subr.bf16.mxu0 0
  %272 = vmatpush2.bf16.msra.mxu0 0
  %273 = vmatprep.subr.bf16.mxu0 0
  %274 = vmatpush2.bf16.msra.mxu0 0
  %275 = vmatprep.subr.bf16.mxu0 0
  %276 = vmatpush2.bf16.msra.mxu0 0
  %277 = vmatprep.subr.bf16.mxu0 0
  %278 = vmatpush2.bf16.msra.mxu0 0
  %279 = vmatprep.subr.bf16.mxu0 0
  %280 = vmatpush2.bf16.msra.mxu0 0
  %281 = vmatprep.subr.bf16.mxu0 0
  %282 = vmatpush2.bf16.msra.mxu0 0
  %283 = vmatprep.subr.bf16.mxu0 0
  %284 = vmatpush2.bf16.msra.mxu0 0
  %285 = vmatprep.subr.bf16.mxu0 0
  %286 = vmatpush2.bf16.msra.mxu0 0
  %287 = vmatprep.mubr.bf16.mxu0 0
  %288 = vmatmul.mubr.bf16.gmra.mxu0 %v253
  %v289 = vpop.f32.mrf.mxu0
  %v290 = vadd.f32 0.0, %v289
  %v291 = vpop.f32.mrf.mxu0
  %v292 = vadd.f32 0.0, %v291
  %v293 = vpop.f32.mrf.mxu0
  %v294 = vpop.f32.mrf.mxu0
  %295 = vdwg.mxu0
  %v296 = vadd.f32 %v165, %v290
  %v297 = vadd.f32 %v167, %v292
  %v298 = vxor.u32 %v296, 2147483648
  %v299 = vxor.u32 %v297, 2147483648
  %v300 = vmul.f32 %v298, 1.442695
  %v301 = vpow.pop %v300
  %v302 = vmul.f32 %v299, 1.442695
  %v303 = vpow.pop %v302
  %v304 = vadd.f32 %v301, 1.0
  %v305 = vadd.f32 %v303, 1.0
  %v306 = vrcp.pop %v304
  %v307 = vmul.f32 1.0, %v306
  %v308 = vrcp.pop %v305
  %v309 = vmul.f32 1.0, %v308
  %v310 = vtanh.pop %v297
  %v311 = vmul.f32 %v307, 0.0
  %313 = vrot.lane.b32.xlu0 %v310, 64
  %v314 = vpop.permute.xlu0 %313
  %v316 = vmul.f32 %v307, %v314
  %318 = vrot.lane.b32.xlu0 %v316, 64
  %v319 = vpop.permute.xlu0 %318
  %v321 = vadd.f32 %v311, %v319
  %v322 = vtanh.pop %v321
  %324 = vrot.lane.b32.xlu0 %v322, 64
  %v325 = vpop.permute.xlu0 %324
  %v327 = vmul.f32 %v309, %v325
  %v328 = vpack.c.bf16 %v327, %v327
  %v330 = vsel %vm251, %v328, 0
  %332 = vmatprep.subr.bf16.mxu0 0
  %333 = vmatpush1.bf16.msra.mxu0 0
  %334 = vmatprep.subr.bf16.mxu0 0
  %335 = vmatpush1.bf16.msra.mxu0 0
  %336 = vmatprep.subr.bf16.mxu0 0
  %337 = vmatpush1.bf16.msra.mxu0 0
  %338 = vmatprep.subr.bf16.mxu0 0
  %339 = vmatpush1.bf16.msra.mxu0 0
  %340 = vmatprep.subr.bf16.mxu0 %v242
  %341 = vmatpush1.bf16.msra.mxu0 %v241
  %342 = vmatprep.subr.bf16.mxu0 %v240
  %343 = vmatpush1.bf16.msra.mxu0 %v239
  %344 = vmatprep.subr.bf16.mxu0 %v238
  %345 = vmatpush1.bf16.msra.mxu0 %v237
  %346 = vmatprep.subr.bf16.mxu0 %v236
  %347 = vmatpush1.bf16.msra.mxu0 %v235
  %348 = vmatprep.subr.bf16.mxu0 0
  %349 = vmatpush2.bf16.msra.mxu0 0
  %350 = vmatprep.subr.bf16.mxu0 0
  %351 = vmatpush2.bf16.msra.mxu0 0
  %352 = vmatprep.subr.bf16.mxu0 0
  %353 = vmatpush2.bf16.msra.mxu0 0
  %354 = vmatprep.subr.bf16.mxu0 0
  %355 = vmatpush2.bf16.msra.mxu0 0
  %356 = vmatprep.subr.bf16.mxu0 0
  %357 = vmatpush2.bf16.msra.mxu0 0
  %358 = vmatprep.subr.bf16.mxu0 0
  %359 = vmatpush2.bf16.msra.mxu0 0
  %360 = vmatprep.subr.bf16.mxu0 0
  %361 = vmatpush2.bf16.msra.mxu0 0
  %362 = vmatprep.subr.bf16.mxu0 0
  %363 = vmatpush2.bf16.msra.mxu0 0
  %364 = vmatprep.mubr.bf16.mxu0 0
  %365 = vmatmul.mubr.bf16.gmra.mxu0 %v330
  %v366 = vpop.f32.mrf.mxu0
  %v367 = vadd.f32 0.0, %v366
  %v368 = vpop.f32.mrf.mxu0
  %v369 = vadd.f32 0.0, %v368
  %v370 = vpop.f32.mrf.mxu0
  %v371 = vpop.f32.mrf.mxu0
  %372 = vdwg.mxu0
  %v373 = vadd.f32 %v169, %v367
  %v374 = vadd.f32 %v171, %v369
  %v375 = vxor.u32 %v373, 2147483648
  %v376 = vxor.u32 %v374, 2147483648
  %v377 = vmul.f32 %v375, 1.442695
  %v378 = vpow.pop %v377
  %v379 = vmul.f32 %v376, 1.442695
  %v380 = vpow.pop %v379
  %v381 = vadd.f32 %v378, 1.0
  %v382 = vadd.f32 %v380, 1.0
  %v383 = vrcp.pop %v381
  %v384 = vmul.f32 1.0, %v383
  %v385 = vrcp.pop %v382
  %v386 = vmul.f32 1.0, %v385
  %v387 = vtanh.pop %v374
  %v388 = vmul.f32 %v384, %v321
  %390 = vrot.lane.b32.xlu0 %v387, 64
  %v391 = vpop.permute.xlu0 %390
  %v393 = vmul.f32 %v384, %v391
  %395 = vrot.lane.b32.xlu0 %v393, 64
  %v396 = vpop.permute.xlu0 %395
  %v398 = vadd.f32 %v388, %v396
  %v399 = vtanh.pop %v398
  %401 = vrot.lane.b32.xlu0 %v399, 64
  %v402 = vpop.permute.xlu0 %401
  %v404 = vmul.f32 %v386, %v402
  %v405 = vpack.c.bf16 %v404, %v404
  %v407 = vsel %vm251, %v405, 0
  %409 = vmatprep.subr.bf16.mxu0 0
  %410 = vmatpush1.bf16.msra.mxu0 0
  %411 = vmatprep.subr.bf16.mxu0 0
  %412 = vmatpush1.bf16.msra.mxu0 0
  %413 = vmatprep.subr.bf16.mxu0 0
  %414 = vmatpush1.bf16.msra.mxu0 0
  %415 = vmatprep.subr.bf16.mxu0 0
  %416 = vmatpush1.bf16.msra.mxu0 0
  %417 = vmatprep.subr.bf16.mxu0 %v242
  %418 = vmatpush1.bf16.msra.mxu0 %v241
  %419 = vmatprep.subr.bf16.mxu0 %v240
  %420 = vmatpush1.bf16.msra.mxu0 %v239
  %421 = vmatprep.subr.bf16.mxu0 %v238
  %422 = vmatpush1.bf16.msra.mxu0 %v237
  %423 = vmatprep.subr.bf16.mxu0 %v236
  %424 = vmatpush1.bf16.msra.mxu0 %v235
  %425 = vmatprep.subr.bf16.mxu0 0
  %426 = vmatpush2.bf16.msra.mxu0 0
  %427 = vmatprep.subr.bf16.mxu0 0
  %428 = vmatpush2.bf16.msra.mxu0 0
  %429 = vmatprep.subr.bf16.mxu0 0
  %430 = vmatpush2.bf16.msra.mxu0 0
  %431 = vmatprep.subr.bf16.mxu0 0
  %432 = vmatpush2.bf16.msra.mxu0 0
  %433 = vmatprep.subr.bf16.mxu0 0
  %434 = vmatpush2.bf16.msra.mxu0 0
  %435 = vmatprep.subr.bf16.mxu0 0
  %436 = vmatpush2.bf16.msra.mxu0 0
  %437 = vmatprep.subr.bf16.mxu0 0
  %438 = vmatpush2.bf16.msra.mxu0 0
  %439 = vmatprep.subr.bf16.mxu0 0
  %440 = vmatpush2.bf16.msra.mxu0 0
  %441 = vmatprep.mubr.bf16.mxu0 0
  %442 = vmatmul.mubr.bf16.gmra.mxu0 %v407
  %v443 = vpop.f32.mrf.mxu0
  %v444 = vadd.f32 0.0, %v443
  %v445 = vpop.f32.mrf.mxu0
  %v446 = vadd.f32 0.0, %v445
  %v447 = vpop.f32.mrf.mxu0
  %v448 = vpop.f32.mrf.mxu0
  %449 = vdwg.mxu0
  %v450 = vadd.f32 %v175, %v444
  %v451 = vadd.f32 %v177, %v446
  %v452 = vxor.u32 %v450, 2147483648
  %v453 = vxor.u32 %v451, 2147483648
  %v454 = vmul.f32 %v452, 1.442695
  %v455 = vpow.pop %v454
  %v456 = vmul.f32 %v453, 1.442695
  %v457 = vpow.pop %v456
  %v458 = vadd.f32 %v455, 1.0
  %v459 = vadd.f32 %v457, 1.0
  %v460 = vrcp.pop %v458
  %v461 = vmul.f32 1.0, %v460
  %v462 = vrcp.pop %v459
  %v463 = vmul.f32 1.0, %v462
  %v464 = vtanh.pop %v451
  %v465 = vmul.f32 %v461, %v398
  %467 = vrot.lane.b32.xlu0 %v464, 64
  %v468 = vpop.permute.xlu0 %467
  %v470 = vmul.f32 %v461, %v468
  %472 = vrot.lane.b32.xlu0 %v470, 64
  %v473 = vpop.permute.xlu0 %472
  %v475 = vadd.f32 %v465, %v473
  %v476 = vtanh.pop %v475
  %478 = vrot.lane.b32.xlu0 %v476, 64
  %v479 = vpop.permute.xlu0 %478
  %v481 = vmul.f32 %v463, %v479
  %v482 = vpack.c.bf16 %v481, %v481
  %v484 = vsel %vm251, %v482, 0
  %486 = vmatprep.subr.bf16.mxu0 0
  %487 = vmatpush1.bf16.msra.mxu0 0
  %488 = vmatprep.subr.bf16.mxu0 0
  %489 = vmatpush1.bf16.msra.mxu0 0
  %490 = vmatprep.subr.bf16.mxu0 0
  %491 = vmatpush1.bf16.msra.mxu0 0
  %492 = vmatprep.subr.bf16.mxu0 0
  %493 = vmatpush1.bf16.msra.mxu0 0
  %494 = vmatprep.subr.bf16.mxu0 %v242
  %495 = vmatpush1.bf16.msra.mxu0 %v241
  %496 = vmatprep.subr.bf16.mxu0 %v240
  %497 = vmatpush1.bf16.msra.mxu0 %v239
  %498 = vmatprep.subr.bf16.mxu0 %v238
  %499 = vmatpush1.bf16.msra.mxu0 %v237
  %500 = vmatprep.subr.bf16.mxu0 %v236
  %501 = vmatpush1.bf16.msra.mxu0 %v235
  %502 = vmatprep.subr.bf16.mxu0 0
  %503 = vmatpush2.bf16.msra.mxu0 0
  %504 = vmatprep.subr.bf16.mxu0 0
  %505 = vmatpush2.bf16.msra.mxu0 0
  %506 = vmatprep.subr.bf16.mxu0 0
  %507 = vmatpush2.bf16.msra.mxu0 0
  %508 = vmatprep.subr.bf16.mxu0 0
  %509 = vmatpush2.bf16.msra.mxu0 0
  %510 = vmatprep.subr.bf16.mxu0 0
  %511 = vmatpush2.bf16.msra.mxu0 0
  %512 = vmatprep.subr.bf16.mxu0 0
  %513 = vmatpush2.bf16.msra.mxu0 0
  %514 = vmatprep.subr.bf16.mxu0 0
  %515 = vmatpush2.bf16.msra.mxu0 0
  %516 = vmatprep.subr.bf16.mxu0 0
  %517 = vmatpush2.bf16.msra.mxu0 0
  %518 = vmatprep.mubr.bf16.mxu0 0
  %519 = vmatmul.mubr.bf16.gmra.mxu0 %v484
  %v520 = vpop.f32.mrf.mxu0
  %v521 = vadd.f32 0.0, %v520
  %v522 = vpop.f32.mrf.mxu0
  %v523 = vadd.f32 0.0, %v522
  %v524 = vpop.f32.mrf.mxu0
  %v525 = vpop.f32.mrf.mxu0
  %526 = vdwg.mxu0
  %v527 = vadd.f32 %v179, %v521
  %v528 = vadd.f32 %v181, %v523
  %v529 = vxor.u32 %v527, 2147483648
  %v530 = vxor.u32 %v528, 2147483648
  %v531 = vmul.f32 %v529, 1.442695
  %v532 = vpow.pop %v531
  %v533 = vmul.f32 %v530, 1.442695
  %v534 = vpow.pop %v533
  %v535 = vadd.f32 %v532, 1.0
  %v536 = vadd.f32 %v534, 1.0
  %v537 = vrcp.pop %v535
  %v538 = vmul.f32 1.0, %v537
  %v539 = vrcp.pop %v536
  %v540 = vmul.f32 1.0, %v539
  %v541 = vtanh.pop %v528
  %v542 = vmul.f32 %v538, %v475
  %544 = vrot.lane.b32.xlu0 %v541, 64
  %v545 = vpop.permute.xlu0 %544
  %v547 = vmul.f32 %v538, %v545
  %549 = vrot.lane.b32.xlu0 %v547, 64
  %v550 = vpop.permute.xlu0 %549
  %v552 = vadd.f32 %v542, %v550
  %v553 = vtanh.pop %v552
  %555 = vrot.lane.b32.xlu0 %v553, 64
  %v556 = vpop.permute.xlu0 %555
  %v558 = vmul.f32 %v540, %v556
  %v559 = vpack.c.bf16 %v558, %v558
  %v561 = vsel %vm251, %v559, 0
  %563 = vmatprep.subr.bf16.mxu0 0
  %564 = vmatpush1.bf16.msra.mxu0 0
  %565 = vmatprep.subr.bf16.mxu0 0
  %566 = vmatpush1.bf16.msra.mxu0 0
  %567 = vmatprep.subr.bf16.mxu0 0
  %568 = vmatpush1.bf16.msra.mxu0 0
  %569 = vmatprep.subr.bf16.mxu0 0
  %570 = vmatpush1.bf16.msra.mxu0 0
  %571 = vmatprep.subr.bf16.mxu0 %v242
  %572 = vmatpush1.bf16.msra.mxu0 %v241
  %573 = vmatprep.subr.bf16.mxu0 %v240
  %574 = vmatpush1.bf16.msra.mxu0 %v239
  %575 = vmatprep.subr.bf16.mxu0 %v238
  %576 = vmatpush1.bf16.msra.mxu0 %v237
  %577 = vmatprep.subr.bf16.mxu0 %v236
  %578 = vmatpush1.bf16.msra.mxu0 %v235
  %579 = vmatprep.subr.bf16.mxu0 0
  %580 = vmatpush2.bf16.msra.mxu0 0
  %581 = vmatprep.subr.bf16.mxu0 0
  %582 = vmatpush2.bf16.msra.mxu0 0
  %583 = vmatprep.subr.bf16.mxu0 0
  %584 = vmatpush2.bf16.msra.mxu0 0
  %585 = vmatprep.subr.bf16.mxu0 0
  %586 = vmatpush2.bf16.msra.mxu0 0
  %587 = vmatprep.subr.bf16.mxu0 0
  %588 = vmatpush2.bf16.msra.mxu0 0
  %589 = vmatprep.subr.bf16.mxu0 0
  %590 = vmatpush2.bf16.msra.mxu0 0
  %591 = vmatprep.subr.bf16.mxu0 0
  %592 = vmatpush2.bf16.msra.mxu0 0
  %593 = vmatprep.subr.bf16.mxu0 0
  %594 = vmatpush2.bf16.msra.mxu0 0
  %595 = vmatprep.mubr.bf16.mxu0 0
  %596 = vmatmul.mubr.bf16.gmra.mxu0 %v561
  %v597 = vpop.f32.mrf.mxu0
  %v598 = vadd.f32 0.0, %v597
  %v599 = vpop.f32.mrf.mxu0
  %v600 = vadd.f32 0.0, %v599
  %v601 = vpop.f32.mrf.mxu0
  %v602 = vpop.f32.mrf.mxu0
  %603 = vdwg.mxu0
  %v604 = vadd.f32 %v185, %v598
  %v605 = vadd.f32 %v187, %v600
  %v606 = vxor.u32 %v604, 2147483648
  %v607 = vxor.u32 %v605, 2147483648
  %v608 = vmul.f32 %v606, 1.442695
  %v609 = vpow.pop %v608
  %v610 = vmul.f32 %v607, 1.442695
  %v611 = vpow.pop %v610
  %v612 = vadd.f32 %v609, 1.0
  %v613 = vadd.f32 %v611, 1.0
  %v614 = vrcp.pop %v612
  %v615 = vmul.f32 1.0, %v614
  %v616 = vrcp.pop %v613
  %v617 = vmul.f32 1.0, %v616
  %v618 = vtanh.pop %v605
  %v619 = vmul.f32 %v615, %v552
  %621 = vrot.lane.b32.xlu0 %v618, 64
  %v622 = vpop.permute.xlu0 %621
  %v624 = vmul.f32 %v615, %v622
  %626 = vrot.lane.b32.xlu0 %v624, 64
  %v627 = vpop.permute.xlu0 %626
  %v629 = vadd.f32 %v619, %v627
  %v630 = vtanh.pop %v629
  %632 = vrot.lane.b32.xlu0 %v630, 64
  %v633 = vpop.permute.xlu0 %632
  %v635 = vmul.f32 %v617, %v633
  %v636 = vpack.c.bf16 %v635, %v635
  %v638 = vsel %vm251, %v636, 0
  %640 = vmatprep.subr.bf16.mxu0 0
  %641 = vmatpush1.bf16.msra.mxu0 0
  %642 = vmatprep.subr.bf16.mxu0 0
  %643 = vmatpush1.bf16.msra.mxu0 0
  %644 = vmatprep.subr.bf16.mxu0 0
  %645 = vmatpush1.bf16.msra.mxu0 0
  %646 = vmatprep.subr.bf16.mxu0 0
  %647 = vmatpush1.bf16.msra.mxu0 0
  %648 = vmatprep.subr.bf16.mxu0 %v242
  %649 = vmatpush1.bf16.msra.mxu0 %v241
  %650 = vmatprep.subr.bf16.mxu0 %v240
  %651 = vmatpush1.bf16.msra.mxu0 %v239
  %652 = vmatprep.subr.bf16.mxu0 %v238
  %653 = vmatpush1.bf16.msra.mxu0 %v237
  %654 = vmatprep.subr.bf16.mxu0 %v236
  %655 = vmatpush1.bf16.msra.mxu0 %v235
  %656 = vmatprep.subr.bf16.mxu0 0
  %657 = vmatpush2.bf16.msra.mxu0 0
  %658 = vmatprep.subr.bf16.mxu0 0
  %659 = vmatpush2.bf16.msra.mxu0 0
  %660 = vmatprep.subr.bf16.mxu0 0
  %661 = vmatpush2.bf16.msra.mxu0 0
  %662 = vmatprep.subr.bf16.mxu0 0
  %663 = vmatpush2.bf16.msra.mxu0 0
  %664 = vmatprep.subr.bf16.mxu0 0
  %665 = vmatpush2.bf16.msra.mxu0 0
  %666 = vmatprep.subr.bf16.mxu0 0
  %667 = vmatpush2.bf16.msra.mxu0 0
  %668 = vmatprep.subr.bf16.mxu0 0
  %669 = vmatpush2.bf16.msra.mxu0 0
  %670 = vmatprep.subr.bf16.mxu0 0
  %671 = vmatpush2.bf16.msra.mxu0 0
  %672 = vmatprep.mubr.bf16.mxu0 0
  %673 = vmatmul.mubr.bf16.gmra.mxu0 %v638
  %v674 = vpop.f32.mrf.mxu0
  %v675 = vadd.f32 0.0, %v674
  %v676 = vpop.f32.mrf.mxu0
  %v677 = vadd.f32 0.0, %v676
  %v678 = vpop.f32.mrf.mxu0
  %v679 = vpop.f32.mrf.mxu0
  %680 = vdwg.mxu0
  %v681 = vadd.f32 %v189, %v675
  %v682 = vadd.f32 %v191, %v677
  %v683 = vxor.u32 %v681, 2147483648
  %v684 = vxor.u32 %v682, 2147483648
  %v685 = vmul.f32 %v683, 1.442695
  %v686 = vpow.pop %v685
  %v687 = vmul.f32 %v684, 1.442695
  %v688 = vpow.pop %v687
  %v689 = vadd.f32 %v686, 1.0
  %v690 = vadd.f32 %v688, 1.0
  %v691 = vrcp.pop %v689
  %v692 = vmul.f32 1.0, %v691
  %v693 = vrcp.pop %v690
  %v694 = vmul.f32 1.0, %v693
  %v695 = vtanh.pop %v682
  %v696 = vmul.f32 %v692, %v629
  %698 = vrot.lane.b32.xlu0 %v695, 64
  %v699 = vpop.permute.xlu0 %698
  %v701 = vmul.f32 %v692, %v699
  %703 = vrot.lane.b32.xlu0 %v701, 64
  %v704 = vpop.permute.xlu0 %703
  %v706 = vadd.f32 %v696, %v704
  %v707 = vtanh.pop %v706
  %709 = vrot.lane.b32.xlu0 %v707, 64
  %v710 = vpop.permute.xlu0 %709
  %v712 = vmul.f32 %v694, %v710
  %v713 = vpack.c.bf16 %v712, %v712
  %v715 = vsel %vm251, %v713, 0
  %717 = vmatprep.subr.bf16.mxu0 0
  %718 = vmatpush1.bf16.msra.mxu0 0
  %719 = vmatprep.subr.bf16.mxu0 0
  %720 = vmatpush1.bf16.msra.mxu0 0
  %721 = vmatprep.subr.bf16.mxu0 0
  %722 = vmatpush1.bf16.msra.mxu0 0
  %723 = vmatprep.subr.bf16.mxu0 0
  %724 = vmatpush1.bf16.msra.mxu0 0
  %725 = vmatprep.subr.bf16.mxu0 %v242
  %726 = vmatpush1.bf16.msra.mxu0 %v241
  %727 = vmatprep.subr.bf16.mxu0 %v240
  %728 = vmatpush1.bf16.msra.mxu0 %v239
  %729 = vmatprep.subr.bf16.mxu0 %v238
  %730 = vmatpush1.bf16.msra.mxu0 %v237
  %731 = vmatprep.subr.bf16.mxu0 %v236
  %732 = vmatpush1.bf16.msra.mxu0 %v235
  %733 = vmatprep.subr.bf16.mxu0 0
  %734 = vmatpush2.bf16.msra.mxu0 0
  %735 = vmatprep.subr.bf16.mxu0 0
  %736 = vmatpush2.bf16.msra.mxu0 0
  %737 = vmatprep.subr.bf16.mxu0 0
  %738 = vmatpush2.bf16.msra.mxu0 0
  %739 = vmatprep.subr.bf16.mxu0 0
  %740 = vmatpush2.bf16.msra.mxu0 0
  %741 = vmatprep.subr.bf16.mxu0 0
  %742 = vmatpush2.bf16.msra.mxu0 0
  %743 = vmatprep.subr.bf16.mxu0 0
  %744 = vmatpush2.bf16.msra.mxu0 0
  %745 = vmatprep.subr.bf16.mxu0 0
  %746 = vmatpush2.bf16.msra.mxu0 0
  %747 = vmatprep.subr.bf16.mxu0 0
  %748 = vmatpush2.bf16.msra.mxu0 0
  %749 = vmatprep.mubr.bf16.mxu0 0
  %750 = vmatmul.mubr.bf16.gmra.mxu0 %v715
  %v751 = vpop.f32.mrf.mxu0
  %v752 = vadd.f32 0.0, %v751
  %v753 = vpop.f32.mrf.mxu0
  %v754 = vadd.f32 0.0, %v753
  %v755 = vpop.f32.mrf.mxu0
  %v756 = vpop.f32.mrf.mxu0
  %757 = vdwg.mxu0
  %v758 = vadd.f32 %v195, %v752
  %v759 = vadd.f32 %v197, %v754
  %v760 = vxor.u32 %v758, 2147483648
  %v761 = vxor.u32 %v759, 2147483648
  %v762 = vmul.f32 %v760, 1.442695
  %v763 = vpow.pop %v762
  %v764 = vmul.f32 %v761, 1.442695
  %v765 = vpow.pop %v764
  %v766 = vadd.f32 %v763, 1.0
  %v767 = vadd.f32 %v765, 1.0
  %v768 = vrcp.pop %v766
  %v769 = vmul.f32 1.0, %v768
  %v770 = vrcp.pop %v767
  %v771 = vmul.f32 1.0, %v770
  %v772 = vtanh.pop %v759
  %v773 = vmul.f32 %v769, %v706
  %775 = vrot.lane.b32.xlu0 %v772, 64
  %v776 = vpop.permute.xlu0 %775
  %v778 = vmul.f32 %v769, %v776
  %780 = vrot.lane.b32.xlu0 %v778, 64
  %v781 = vpop.permute.xlu0 %780
  %v783 = vadd.f32 %v773, %v781
  %v784 = vtanh.pop %v783
  %786 = vrot.lane.b32.xlu0 %v784, 64
  %v787 = vpop.permute.xlu0 %786
  %v789 = vmul.f32 %v771, %v787
  %v790 = vpack.c.bf16 %v789, %v789
  %v792 = vsel %vm251, %v790, 0
  %794 = vmatprep.subr.bf16.mxu0 0
  %795 = vmatpush1.bf16.msra.mxu0 0
  %796 = vmatprep.subr.bf16.mxu0 0
  %797 = vmatpush1.bf16.msra.mxu0 0
  %798 = vmatprep.subr.bf16.mxu0 0
  %799 = vmatpush1.bf16.msra.mxu0 0
  %800 = vmatprep.subr.bf16.mxu0 0
  %801 = vmatpush1.bf16.msra.mxu0 0
  %802 = vmatprep.subr.bf16.mxu0 %v242
  %803 = vmatpush1.bf16.msra.mxu0 %v241
  %804 = vmatprep.subr.bf16.mxu0 %v240
  %805 = vmatpush1.bf16.msra.mxu0 %v239
  %806 = vmatprep.subr.bf16.mxu0 %v238
  %807 = vmatpush1.bf16.msra.mxu0 %v237
  %808 = vmatprep.subr.bf16.mxu0 %v236
  %809 = vmatpush1.bf16.msra.mxu0 %v235
  %810 = vmatprep.subr.bf16.mxu0 0
  %811 = vmatpush2.bf16.msra.mxu0 0
  %812 = vmatprep.subr.bf16.mxu0 0
  %813 = vmatpush2.bf16.msra.mxu0 0
  %814 = vmatprep.subr.bf16.mxu0 0
  %815 = vmatpush2.bf16.msra.mxu0 0
  %816 = vmatprep.subr.bf16.mxu0 0
  %817 = vmatpush2.bf16.msra.mxu0 0
  %818 = vmatprep.subr.bf16.mxu0 0
  %819 = vmatpush2.bf16.msra.mxu0 0
  %820 = vmatprep.subr.bf16.mxu0 0
  %821 = vmatpush2.bf16.msra.mxu0 0
  %822 = vmatprep.subr.bf16.mxu0 0
  %823 = vmatpush2.bf16.msra.mxu0 0
  %824 = vmatprep.subr.bf16.mxu0 0
  %825 = vmatpush2.bf16.msra.mxu0 0
  %826 = vmatprep.mubr.bf16.mxu0 0
  %827 = vmatmul.mubr.bf16.gmra.mxu0 %v792
  %v828 = vpop.f32.mrf.mxu0
  %v829 = vadd.f32 0.0, %v828
  %v830 = vpop.f32.mrf.mxu0
  %v831 = vadd.f32 0.0, %v830
  %v832 = vpop.f32.mrf.mxu0
  %v833 = vpop.f32.mrf.mxu0
  %834 = vdwg.mxu0
  %v835 = vadd.f32 %v199, %v829
  %v836 = vadd.f32 %v201, %v831
  %v837 = vxor.u32 %v835, 2147483648
  %v838 = vxor.u32 %v836, 2147483648
  %v839 = vmul.f32 %v837, 1.442695
  %v840 = vpow.pop %v839
  %v841 = vmul.f32 %v838, 1.442695
  %v842 = vpow.pop %v841
  %v843 = vadd.f32 %v840, 1.0
  %v844 = vadd.f32 %v842, 1.0
  %v845 = vrcp.pop %v843
  %v846 = vmul.f32 1.0, %v845
  %v847 = vrcp.pop %v844
  %v848 = vmul.f32 1.0, %v847
  %v849 = vtanh.pop %v836
  %v850 = vmul.f32 %v846, %v783
  %852 = vrot.lane.b32.xlu0 %v849, 64
  %v853 = vpop.permute.xlu0 %852
  %v855 = vmul.f32 %v846, %v853
  %857 = vrot.lane.b32.xlu0 %v855, 64
  %v858 = vpop.permute.xlu0 %857
  %v860 = vadd.f32 %v850, %v858
  %v861 = vtanh.pop %v860
  %863 = vrot.lane.b32.xlu0 %v861, 64
  %v864 = vpop.permute.xlu0 %863
  %v866 = vmul.f32 %v848, %v864
  %v867 = vsel %vm117, %v327, %v866
  %v868 = vsel %vm117, %v404, %v789
  %v869 = vsel %vm117, %v481, %v712
  %v870 = vsel %vm117, %v558, %v635
  %v871 = vsel %vm117, %v635, %v558
  %v872 = vsel %vm117, %v712, %v481
  %v873 = vsel %vm117, %v789, %v404
  %v874 = vsel %vm117, %v866, %v327
  %876 = vrot.lane.b32.xlu0 %v874, 64
  %v877 = vpop.permute.xlu0 %876
  %v879 = vsel %vm251, %v867, %v877
  %881 = vrot.lane.b32.xlu0 %v873, 64
  %v882 = vpop.permute.xlu0 %881
  %v884 = vsel %vm251, %v868, %v882
  %886 = vrot.lane.b32.xlu0 %v872, 64
  %v887 = vpop.permute.xlu0 %886
  %v889 = vsel %vm251, %v869, %v887
  %891 = vrot.lane.b32.xlu0 %v871, 64
  %v892 = vpop.permute.xlu0 %891
  %v894 = vsel %vm251, %v870, %v892
  %896 = vrot.lane.b32.xlu0 %v870, 64
  %v897 = vpop.permute.xlu0 %896
  %v899 = vsel %vm251, %v871, %v897
  %901 = vrot.lane.b32.xlu0 %v869, 64
  %v902 = vpop.permute.xlu0 %901
  %v904 = vsel %vm251, %v872, %v902
  %906 = vrot.lane.b32.xlu0 %v868, 64
  %v907 = vpop.permute.xlu0 %906
  %v909 = vsel %vm251, %v873, %v907
  %911 = vrot.lane.b32.xlu0 %v867, 64
  %v912 = vpop.permute.xlu0 %911
  %v914 = vsel %vm251, %v874, %v912
  %v915 = vld [vmem:[%s4] sm:$0xff]
  %v916 = vld [vmem:[%s4 + $0x8] sm:$0xff]
  %v917 = vld [vmem:[%s4 + $0x10] sm:$0xff]
  %v918 = vld [vmem:[%s4 + $0x18] sm:$0xff]
  %v919 = vld [vmem:[%s4 + $0x20] sm:$0xff]
  %v920 = vld [vmem:[%s4 + $0x28] sm:$0xff]
  %v921 = vld [vmem:[%s4 + $0x30] sm:$0xff]
  %v922 = vld [vmem:[%s4 + $0x38] sm:$0xff]
  %v923 = vld [vmem:[%s4 + $0x40] sm:$0xff]
  %v924 = vld [vmem:[%s4 + $0x48] sm:$0xff]
  %v925 = vld [vmem:[%s4 + $0x50] sm:$0xff]
  %v926 = vld [vmem:[%s4 + $0x58] sm:$0xff]
  %v927 = vld [vmem:[%s4 + $0x60] sm:$0xff]
  %v928 = vld [vmem:[%s4 + $0x68] sm:$0xff]
  %v929 = vld [vmem:[%s4 + $0x70] sm:$0xff]
  %v930 = vld [vmem:[%s4 + $0x78] sm:$0xff]
  %v931 = vld [vmem:[%s6] sm:$0x3]
  %v932 = vpack.c.bf16 %v884, %v879
  %v933 = vpack.c.bf16 %v894, %v889
  %v934 = vpack.c.bf16 %v904, %v899
  %v935 = vpack.c.bf16 %v914, %v909
  %v937 = vlaneseq
  %v938 = vshrl.u32 %v937, 7
  %v939 = vsub.s32 0, %v938
  %v940 = vrot.slane %v931, %v939
  %v941 = vlaneseq
  %v942 = vshrl.u32 %v941, 7
  %v943 = vsub.s32 1, %v942
  %v944 = vrot.slane %v931, %v943
  %v963 = vunpack.c.l.b16 %v915
  %v964 = vunpack.c.h.b16 %v915
  %v965 = vunpack.c.l.b16 %v916
  %v966 = vunpack.c.h.b16 %v916
  %v967 = vunpack.c.l.b16 %v917
  %v968 = vunpack.c.h.b16 %v917
  %v969 = vunpack.c.l.b16 %v918
  %v970 = vunpack.c.h.b16 %v918
  %v971 = vunpack.c.l.b16 %v919
  %v972 = vunpack.c.h.b16 %v919
  %v973 = vunpack.c.l.b16 %v920
  %v974 = vunpack.c.h.b16 %v920
  %v975 = vunpack.c.l.b16 %v921
  %v976 = vunpack.c.h.b16 %v921
  %v977 = vunpack.c.l.b16 %v922
  %v978 = vunpack.c.h.b16 %v922
  %v979 = vunpack.c.l.b16 %v923
  %v980 = vunpack.c.h.b16 %v923
  %v981 = vunpack.c.l.b16 %v924
  %v982 = vunpack.c.h.b16 %v924
  %v983 = vunpack.c.l.b16 %v925
  %v984 = vunpack.c.h.b16 %v925
  %v985 = vunpack.c.l.b16 %v926
  %v986 = vunpack.c.h.b16 %v926
  %v987 = vunpack.c.l.b16 %v927
  %v988 = vunpack.c.h.b16 %v927
  %v989 = vunpack.c.l.b16 %v928
  %v990 = vunpack.c.h.b16 %v928
  %v991 = vunpack.c.l.b16 %v929
  %v992 = vunpack.c.h.b16 %v929
  %v993 = vunpack.c.l.b16 %v930
  %v994 = vunpack.c.h.b16 %v930
  %v995 = vpack.c.b16 %v965, %v963
  %v996 = vpack.c.b16 %v966, %v964
  %v997 = vpack.c.b16 %v969, %v967
  %v998 = vpack.c.b16 %v970, %v968
  %v999 = vpack.c.b16 %v973, %v971
  %v1000 = vpack.c.b16 %v974, %v972
  %v1001 = vpack.c.b16 %v977, %v975
  %v1002 = vpack.c.b16 %v978, %v976
  %v1003 = vpack.c.b16 %v981, %v979
  %v1004 = vpack.c.b16 %v982, %v980
  %v1005 = vpack.c.b16 %v985, %v983
  %v1006 = vpack.c.b16 %v986, %v984
  %v1007 = vpack.c.b16 %v989, %v987
  %v1008 = vpack.c.b16 %v990, %v988
  %v1009 = vpack.c.b16 %v993, %v991
  %v1010 = vpack.c.b16 %v994, %v992
  %1027 = vmatprep.subr.bf16.mxu0 %v1010
  %1028 = vmatpush1.bf16.msra.mxu0 %v1009
  %1029 = vmatprep.subr.bf16.mxu0 %v1008
  %1030 = vmatpush1.bf16.msra.mxu0 %v1007
  %1031 = vmatprep.subr.bf16.mxu0 %v1006
  %1032 = vmatpush1.bf16.msra.mxu0 %v1005
  %1033 = vmatprep.subr.bf16.mxu0 %v1004
  %1034 = vmatpush1.bf16.msra.mxu0 %v1003
  %1035 = vmatprep.subr.bf16.mxu0 %v1002
  %1036 = vmatpush1.bf16.msra.mxu0 %v1001
  %1037 = vmatprep.subr.bf16.mxu0 %v1000
  %1038 = vmatpush1.bf16.msra.mxu0 %v999
  %1039 = vmatprep.subr.bf16.mxu0 %v998
  %1040 = vmatpush1.bf16.msra.mxu0 %v997
  %1041 = vmatprep.subr.bf16.mxu0 %v996
  %1042 = vmatpush1.bf16.msra.mxu0 %v995
  %1043 = vmatprep.subr.bf16.mxu0 0
  %1044 = vmatpush2.bf16.msra.mxu0 0
  %1045 = vmatprep.subr.bf16.mxu0 0
  %1046 = vmatpush2.bf16.msra.mxu0 0
  %1047 = vmatprep.subr.bf16.mxu0 0
  %1048 = vmatpush2.bf16.msra.mxu0 0
  %1049 = vmatprep.subr.bf16.mxu0 0
  %1050 = vmatpush2.bf16.msra.mxu0 0
  %1051 = vmatprep.subr.bf16.mxu0 0
  %1052 = vmatpush2.bf16.msra.mxu0 0
  %1053 = vmatprep.subr.bf16.mxu0 0
  %1054 = vmatpush2.bf16.msra.mxu0 0
  %1055 = vmatprep.subr.bf16.mxu0 0
  %1056 = vmatpush2.bf16.msra.mxu0 0
  %1057 = vmatprep.subr.bf16.mxu0 0
  %1058 = vmatpush2.bf16.msra.mxu0 0
  %1059 = vmatprep.mubr.bf16.mxu0 0
  %1060 = vmatmul.mubr.bf16.gmra.mxu0 %v932
  %v1061 = vpop.f32.mrf.mxu0
  %v1062 = vadd.f32 %v940, %v1061
  %v1063 = vpop.f32.mrf.mxu0
  %v1064 = vadd.f32 %v944, %v1063
  %v1065 = vpop.f32.mrf.mxu0
  %v1066 = vadd.f32 %v940, %v1065
  %v1067 = vpop.f32.mrf.mxu0
  %v1068 = vadd.f32 %v944, %v1067
  %1069 = vmatprep.mubr.bf16.mxu0 0
  %1070 = vmatmul.mubr.bf16.gmra.mxu0 %v933
  %v1071 = vpop.f32.mrf.mxu0
  %v1072 = vadd.f32 %v940, %v1071
  %v1073 = vpop.f32.mrf.mxu0
  %v1074 = vadd.f32 %v944, %v1073
  %v1075 = vpop.f32.mrf.mxu0
  %v1076 = vadd.f32 %v940, %v1075
  %v1077 = vpop.f32.mrf.mxu0
  %v1078 = vadd.f32 %v944, %v1077
  %1079 = vmatprep.mubr.bf16.mxu0 0
  %1080 = vmatmul.mubr.bf16.gmra.mxu0 %v934
  %v1081 = vpop.f32.mrf.mxu0
  %v1082 = vadd.f32 %v940, %v1081
  %v1083 = vpop.f32.mrf.mxu0
  %v1084 = vadd.f32 %v944, %v1083
  %v1085 = vpop.f32.mrf.mxu0
  %v1086 = vadd.f32 %v940, %v1085
  %v1087 = vpop.f32.mrf.mxu0
  %v1088 = vadd.f32 %v944, %v1087
  %1089 = vmatprep.mubr.bf16.mxu0 0
  %1090 = vmatmul.mubr.bf16.gmra.mxu0 %v935
  %v1091 = vpop.f32.mrf.mxu0
  %v1092 = vadd.f32 %v940, %v1091
  %v1093 = vpop.f32.mrf.mxu0
  %v1094 = vadd.f32 %v944, %v1093
  %v1095 = vpop.f32.mrf.mxu0
  %v1096 = vadd.f32 %v940, %v1095
  %v1097 = vpop.f32.mrf.mxu0
  %v1098 = vadd.f32 %v944, %v1097
  %1099 = vdwg.mxu0
  %v1100 = vld [vmem:[%s5] sm:$0xff]
  %v1101 = vld [vmem:[%s5 + $0x8] sm:$0xff]
  %v1102 = vld [vmem:[%s5 + $0x10] sm:$0xff]
  %v1103 = vld [vmem:[%s5 + $0x18] sm:$0xff]
  %v1104 = vld [vmem:[%s5 + $0x20] sm:$0xff]
  %v1105 = vld [vmem:[%s5 + $0x28] sm:$0xff]
  %v1106 = vld [vmem:[%s5 + $0x30] sm:$0xff]
  %v1107 = vld [vmem:[%s5 + $0x38] sm:$0xff]
  %v1116 = vunpack.c.l.b16 %v1100
  %v1117 = vunpack.c.h.b16 %v1100
  %v1118 = vunpack.c.l.b16 %v1101
  %v1119 = vunpack.c.h.b16 %v1101
  %v1120 = vunpack.c.l.b16 %v1102
  %v1121 = vunpack.c.h.b16 %v1102
  %v1122 = vunpack.c.l.b16 %v1103
  %v1123 = vunpack.c.h.b16 %v1103
  %v1124 = vunpack.c.l.b16 %v1104
  %v1125 = vunpack.c.h.b16 %v1104
  %v1126 = vunpack.c.l.b16 %v1105
  %v1127 = vunpack.c.h.b16 %v1105
  %v1128 = vunpack.c.l.b16 %v1106
  %v1129 = vunpack.c.h.b16 %v1106
  %v1130 = vunpack.c.l.b16 %v1107
  %v1131 = vunpack.c.h.b16 %v1107
  %v1132 = vpack.c.b16 %v1118, %v1116
  %v1133 = vpack.c.b16 %v1119, %v1117
  %v1134 = vpack.c.b16 %v1122, %v1120
  %v1135 = vpack.c.b16 %v1123, %v1121
  %v1136 = vpack.c.b16 %v1126, %v1124
  %v1137 = vpack.c.b16 %v1127, %v1125
  %v1138 = vpack.c.b16 %v1130, %v1128
  %v1139 = vpack.c.b16 %v1131, %v1129
  %1148 = vmatprep.subr.bf16.mxu0 0
  %1149 = vmatpush1.bf16.msra.mxu0 0
  %1150 = vmatprep.subr.bf16.mxu0 0
  %1151 = vmatpush1.bf16.msra.mxu0 0
  %1152 = vmatprep.subr.bf16.mxu0 0
  %1153 = vmatpush1.bf16.msra.mxu0 0
  %1154 = vmatprep.subr.bf16.mxu0 0
  %1155 = vmatpush1.bf16.msra.mxu0 0
  %1156 = vmatprep.subr.bf16.mxu0 %v1139
  %1157 = vmatpush1.bf16.msra.mxu0 %v1138
  %1158 = vmatprep.subr.bf16.mxu0 %v1137
  %1159 = vmatpush1.bf16.msra.mxu0 %v1136
  %1160 = vmatprep.subr.bf16.mxu0 %v1135
  %1161 = vmatpush1.bf16.msra.mxu0 %v1134
  %1162 = vmatprep.subr.bf16.mxu0 %v1133
  %1163 = vmatpush1.bf16.msra.mxu0 %v1132
  %1164 = vmatprep.subr.bf16.mxu0 0
  %1165 = vmatpush2.bf16.msra.mxu0 0
  %1166 = vmatprep.subr.bf16.mxu0 0
  %1167 = vmatpush2.bf16.msra.mxu0 0
  %1168 = vmatprep.subr.bf16.mxu0 0
  %1169 = vmatpush2.bf16.msra.mxu0 0
  %1170 = vmatprep.subr.bf16.mxu0 0
  %1171 = vmatpush2.bf16.msra.mxu0 0
  %1172 = vmatprep.subr.bf16.mxu0 0
  %1173 = vmatpush2.bf16.msra.mxu0 0
  %1174 = vmatprep.subr.bf16.mxu0 0
  %1175 = vmatpush2.bf16.msra.mxu0 0
  %1176 = vmatprep.subr.bf16.mxu0 0
  %1177 = vmatpush2.bf16.msra.mxu0 0
  %1178 = vmatprep.subr.bf16.mxu0 0
  %1179 = vmatpush2.bf16.msra.mxu0 0
  %1180 = vmatprep.mubr.bf16.mxu0 0
  %1181 = vmatmul.mubr.bf16.gmra.mxu0 %v253
  %v1182 = vpop.f32.mrf.mxu0
  %v1183 = vadd.f32 0.0, %v1182
  %v1184 = vpop.f32.mrf.mxu0
  %v1185 = vadd.f32 0.0, %v1184
  %v1186 = vpop.f32.mrf.mxu0
  %v1187 = vpop.f32.mrf.mxu0
  %1188 = vdwg.mxu0
  %v1189 = vadd.f32 %v1062, %v1183
  %v1190 = vadd.f32 %v1064, %v1185
  %v1191 = vxor.u32 %v1189, 2147483648
  %v1192 = vxor.u32 %v1190, 2147483648
  %v1193 = vmul.f32 %v1191, 1.442695
  %v1194 = vpow.pop %v1193
  %v1195 = vmul.f32 %v1192, 1.442695
  %v1196 = vpow.pop %v1195
  %v1197 = vadd.f32 %v1194, 1.0
  %v1198 = vadd.f32 %v1196, 1.0
  %v1199 = vrcp.pop %v1197
  %v1200 = vmul.f32 1.0, %v1199
  %v1201 = vrcp.pop %v1198
  %v1202 = vmul.f32 1.0, %v1201
  %v1203 = vtanh.pop %v1190
  %v1204 = vmul.f32 %v1200, 0.0
  %1206 = vrot.lane.b32.xlu0 %v1203, 64
  %v1207 = vpop.permute.xlu0 %1206
  %v1209 = vmul.f32 %v1200, %v1207
  %1211 = vrot.lane.b32.xlu0 %v1209, 64
  %v1212 = vpop.permute.xlu0 %1211
  %v1214 = vadd.f32 %v1204, %v1212
  %v1215 = vtanh.pop %v1214
  %1217 = vrot.lane.b32.xlu0 %v1215, 64
  %v1218 = vpop.permute.xlu0 %1217
  %v1220 = vmul.f32 %v1202, %v1218
  %v1221 = vpack.c.bf16 %v1220, %v1220
  %v1223 = vsel %vm251, %v1221, 0
  %1225 = vmatprep.subr.bf16.mxu0 0
  %1226 = vmatpush1.bf16.msra.mxu0 0
  %1227 = vmatprep.subr.bf16.mxu0 0
  %1228 = vmatpush1.bf16.msra.mxu0 0
  %1229 = vmatprep.subr.bf16.mxu0 0
  %1230 = vmatpush1.bf16.msra.mxu0 0
  %1231 = vmatprep.subr.bf16.mxu0 0
  %1232 = vmatpush1.bf16.msra.mxu0 0
  %1233 = vmatprep.subr.bf16.mxu0 %v1139
  %1234 = vmatpush1.bf16.msra.mxu0 %v1138
  %1235 = vmatprep.subr.bf16.mxu0 %v1137
  %1236 = vmatpush1.bf16.msra.mxu0 %v1136
  %1237 = vmatprep.subr.bf16.mxu0 %v1135
  %1238 = vmatpush1.bf16.msra.mxu0 %v1134
  %1239 = vmatprep.subr.bf16.mxu0 %v1133
  %1240 = vmatpush1.bf16.msra.mxu0 %v1132
  %1241 = vmatprep.subr.bf16.mxu0 0
  %1242 = vmatpush2.bf16.msra.mxu0 0
  %1243 = vmatprep.subr.bf16.mxu0 0
  %1244 = vmatpush2.bf16.msra.mxu0 0
  %1245 = vmatprep.subr.bf16.mxu0 0
  %1246 = vmatpush2.bf16.msra.mxu0 0
  %1247 = vmatprep.subr.bf16.mxu0 0
  %1248 = vmatpush2.bf16.msra.mxu0 0
  %1249 = vmatprep.subr.bf16.mxu0 0
  %1250 = vmatpush2.bf16.msra.mxu0 0
  %1251 = vmatprep.subr.bf16.mxu0 0
  %1252 = vmatpush2.bf16.msra.mxu0 0
  %1253 = vmatprep.subr.bf16.mxu0 0
  %1254 = vmatpush2.bf16.msra.mxu0 0
  %1255 = vmatprep.subr.bf16.mxu0 0
  %1256 = vmatpush2.bf16.msra.mxu0 0
  %1257 = vmatprep.mubr.bf16.mxu0 0
  %1258 = vmatmul.mubr.bf16.gmra.mxu0 %v1223
  %v1259 = vpop.f32.mrf.mxu0
  %v1260 = vadd.f32 0.0, %v1259
  %v1261 = vpop.f32.mrf.mxu0
  %v1262 = vadd.f32 0.0, %v1261
  %v1263 = vpop.f32.mrf.mxu0
  %v1264 = vpop.f32.mrf.mxu0
  %1265 = vdwg.mxu0
  %v1266 = vadd.f32 %v1066, %v1260
  %v1267 = vadd.f32 %v1068, %v1262
  %v1268 = vxor.u32 %v1266, 2147483648
  %v1269 = vxor.u32 %v1267, 2147483648
  %v1270 = vmul.f32 %v1268, 1.442695
  %v1271 = vpow.pop %v1270
  %v1272 = vmul.f32 %v1269, 1.442695
  %v1273 = vpow.pop %v1272
  %v1274 = vadd.f32 %v1271, 1.0
  %v1275 = vadd.f32 %v1273, 1.0
  %v1276 = vrcp.pop %v1274
  %v1277 = vmul.f32 1.0, %v1276
  %v1278 = vrcp.pop %v1275
  %v1279 = vmul.f32 1.0, %v1278
  %v1280 = vtanh.pop %v1267
  %v1281 = vmul.f32 %v1277, %v1214
  %1283 = vrot.lane.b32.xlu0 %v1280, 64
  %v1284 = vpop.permute.xlu0 %1283
  %v1286 = vmul.f32 %v1277, %v1284
  %1288 = vrot.lane.b32.xlu0 %v1286, 64
  %v1289 = vpop.permute.xlu0 %1288
  %v1291 = vadd.f32 %v1281, %v1289
  %v1292 = vtanh.pop %v1291
  %1294 = vrot.lane.b32.xlu0 %v1292, 64
  %v1295 = vpop.permute.xlu0 %1294
  %v1297 = vmul.f32 %v1279, %v1295
  %v1298 = vpack.c.bf16 %v1297, %v1297
  %v1300 = vsel %vm251, %v1298, 0
  %1302 = vmatprep.subr.bf16.mxu0 0
  %1303 = vmatpush1.bf16.msra.mxu0 0
  %1304 = vmatprep.subr.bf16.mxu0 0
  %1305 = vmatpush1.bf16.msra.mxu0 0
  %1306 = vmatprep.subr.bf16.mxu0 0
  %1307 = vmatpush1.bf16.msra.mxu0 0
  %1308 = vmatprep.subr.bf16.mxu0 0
  %1309 = vmatpush1.bf16.msra.mxu0 0
  %1310 = vmatprep.subr.bf16.mxu0 %v1139
  %1311 = vmatpush1.bf16.msra.mxu0 %v1138
  %1312 = vmatprep.subr.bf16.mxu0 %v1137
  %1313 = vmatpush1.bf16.msra.mxu0 %v1136
  %1314 = vmatprep.subr.bf16.mxu0 %v1135
  %1315 = vmatpush1.bf16.msra.mxu0 %v1134
  %1316 = vmatprep.subr.bf16.mxu0 %v1133
  %1317 = vmatpush1.bf16.msra.mxu0 %v1132
  %1318 = vmatprep.subr.bf16.mxu0 0
  %1319 = vmatpush2.bf16.msra.mxu0 0
  %1320 = vmatprep.subr.bf16.mxu0 0
  %1321 = vmatpush2.bf16.msra.mxu0 0
  %1322 = vmatprep.subr.bf16.mxu0 0
  %1323 = vmatpush2.bf16.msra.mxu0 0
  %1324 = vmatprep.subr.bf16.mxu0 0
  %1325 = vmatpush2.bf16.msra.mxu0 0
  %1326 = vmatprep.subr.bf16.mxu0 0
  %1327 = vmatpush2.bf16.msra.mxu0 0
  %1328 = vmatprep.subr.bf16.mxu0 0
  %1329 = vmatpush2.bf16.msra.mxu0 0
  %1330 = vmatprep.subr.bf16.mxu0 0
  %1331 = vmatpush2.bf16.msra.mxu0 0
  %1332 = vmatprep.subr.bf16.mxu0 0
  %1333 = vmatpush2.bf16.msra.mxu0 0
  %1334 = vmatprep.mubr.bf16.mxu0 0
  %1335 = vmatmul.mubr.bf16.gmra.mxu0 %v1300
  %v1336 = vpop.f32.mrf.mxu0
  %v1337 = vadd.f32 0.0, %v1336
  %v1338 = vpop.f32.mrf.mxu0
  %v1339 = vadd.f32 0.0, %v1338
  %v1340 = vpop.f32.mrf.mxu0
  %v1341 = vpop.f32.mrf.mxu0
  %1342 = vdwg.mxu0
  %v1343 = vadd.f32 %v1072, %v1337
  %v1344 = vadd.f32 %v1074, %v1339
  %v1345 = vxor.u32 %v1343, 2147483648
  %v1346 = vxor.u32 %v1344, 2147483648
  %v1347 = vmul.f32 %v1345, 1.442695
  %v1348 = vpow.pop %v1347
  %v1349 = vmul.f32 %v1346, 1.442695
  %v1350 = vpow.pop %v1349
  %v1351 = vadd.f32 %v1348, 1.0
  %v1352 = vadd.f32 %v1350, 1.0
  %v1353 = vrcp.pop %v1351
  %v1354 = vmul.f32 1.0, %v1353
  %v1355 = vrcp.pop %v1352
  %v1356 = vmul.f32 1.0, %v1355
  %v1357 = vtanh.pop %v1344
  %v1358 = vmul.f32 %v1354, %v1291
  %1360 = vrot.lane.b32.xlu0 %v1357, 64
  %v1361 = vpop.permute.xlu0 %1360
  %v1363 = vmul.f32 %v1354, %v1361
  %1365 = vrot.lane.b32.xlu0 %v1363, 64
  %v1366 = vpop.permute.xlu0 %1365
  %v1368 = vadd.f32 %v1358, %v1366
  %v1369 = vtanh.pop %v1368
  %1371 = vrot.lane.b32.xlu0 %v1369, 64
  %v1372 = vpop.permute.xlu0 %1371
  %v1374 = vmul.f32 %v1356, %v1372
  %v1375 = vpack.c.bf16 %v1374, %v1374
  %v1377 = vsel %vm251, %v1375, 0
  %1379 = vmatprep.subr.bf16.mxu0 0
  %1380 = vmatpush1.bf16.msra.mxu0 0
  %1381 = vmatprep.subr.bf16.mxu0 0
  %1382 = vmatpush1.bf16.msra.mxu0 0
  %1383 = vmatprep.subr.bf16.mxu0 0
  %1384 = vmatpush1.bf16.msra.mxu0 0
  %1385 = vmatprep.subr.bf16.mxu0 0
  %1386 = vmatpush1.bf16.msra.mxu0 0
  %1387 = vmatprep.subr.bf16.mxu0 %v1139
  %1388 = vmatpush1.bf16.msra.mxu0 %v1138
  %1389 = vmatprep.subr.bf16.mxu0 %v1137
  %1390 = vmatpush1.bf16.msra.mxu0 %v1136
  %1391 = vmatprep.subr.bf16.mxu0 %v1135
  %1392 = vmatpush1.bf16.msra.mxu0 %v1134
  %1393 = vmatprep.subr.bf16.mxu0 %v1133
  %1394 = vmatpush1.bf16.msra.mxu0 %v1132
  %1395 = vmatprep.subr.bf16.mxu0 0
  %1396 = vmatpush2.bf16.msra.mxu0 0
  %1397 = vmatprep.subr.bf16.mxu0 0
  %1398 = vmatpush2.bf16.msra.mxu0 0
  %1399 = vmatprep.subr.bf16.mxu0 0
  %1400 = vmatpush2.bf16.msra.mxu0 0
  %1401 = vmatprep.subr.bf16.mxu0 0
  %1402 = vmatpush2.bf16.msra.mxu0 0
  %1403 = vmatprep.subr.bf16.mxu0 0
  %1404 = vmatpush2.bf16.msra.mxu0 0
  %1405 = vmatprep.subr.bf16.mxu0 0
  %1406 = vmatpush2.bf16.msra.mxu0 0
  %1407 = vmatprep.subr.bf16.mxu0 0
  %1408 = vmatpush2.bf16.msra.mxu0 0
  %1409 = vmatprep.subr.bf16.mxu0 0
  %1410 = vmatpush2.bf16.msra.mxu0 0
  %1411 = vmatprep.mubr.bf16.mxu0 0
  %1412 = vmatmul.mubr.bf16.gmra.mxu0 %v1377
  %v1413 = vpop.f32.mrf.mxu0
  %v1414 = vadd.f32 0.0, %v1413
  %v1415 = vpop.f32.mrf.mxu0
  %v1416 = vadd.f32 0.0, %v1415
  %v1417 = vpop.f32.mrf.mxu0
  %v1418 = vpop.f32.mrf.mxu0
  %1419 = vdwg.mxu0
  %v1420 = vadd.f32 %v1076, %v1414
  %v1421 = vadd.f32 %v1078, %v1416
  %v1422 = vxor.u32 %v1420, 2147483648
  %v1423 = vxor.u32 %v1421, 2147483648
  %v1424 = vmul.f32 %v1422, 1.442695
  %v1425 = vpow.pop %v1424
  %v1426 = vmul.f32 %v1423, 1.442695
  %v1427 = vpow.pop %v1426
  %v1428 = vadd.f32 %v1425, 1.0
  %v1429 = vadd.f32 %v1427, 1.0
  %v1430 = vrcp.pop %v1428
  %v1431 = vmul.f32 1.0, %v1430
  %v1432 = vrcp.pop %v1429
  %v1433 = vmul.f32 1.0, %v1432
  %v1434 = vtanh.pop %v1421
  %v1435 = vmul.f32 %v1431, %v1368
  %1437 = vrot.lane.b32.xlu0 %v1434, 64
  %v1438 = vpop.permute.xlu0 %1437
  %v1440 = vmul.f32 %v1431, %v1438
  %1442 = vrot.lane.b32.xlu0 %v1440, 64
  %v1443 = vpop.permute.xlu0 %1442
  %v1445 = vadd.f32 %v1435, %v1443
  %v1446 = vtanh.pop %v1445
  %1448 = vrot.lane.b32.xlu0 %v1446, 64
  %v1449 = vpop.permute.xlu0 %1448
  %v1451 = vmul.f32 %v1433, %v1449
  %v1452 = vpack.c.bf16 %v1451, %v1451
  %v1454 = vsel %vm251, %v1452, 0
  %1456 = vmatprep.subr.bf16.mxu0 0
  %1457 = vmatpush1.bf16.msra.mxu0 0
  %1458 = vmatprep.subr.bf16.mxu0 0
  %1459 = vmatpush1.bf16.msra.mxu0 0
  %1460 = vmatprep.subr.bf16.mxu0 0
  %1461 = vmatpush1.bf16.msra.mxu0 0
  %1462 = vmatprep.subr.bf16.mxu0 0
  %1463 = vmatpush1.bf16.msra.mxu0 0
  %1464 = vmatprep.subr.bf16.mxu0 %v1139
  %1465 = vmatpush1.bf16.msra.mxu0 %v1138
  %1466 = vmatprep.subr.bf16.mxu0 %v1137
  %1467 = vmatpush1.bf16.msra.mxu0 %v1136
  %1468 = vmatprep.subr.bf16.mxu0 %v1135
  %1469 = vmatpush1.bf16.msra.mxu0 %v1134
  %1470 = vmatprep.subr.bf16.mxu0 %v1133
  %1471 = vmatpush1.bf16.msra.mxu0 %v1132
  %1472 = vmatprep.subr.bf16.mxu0 0
  %1473 = vmatpush2.bf16.msra.mxu0 0
  %1474 = vmatprep.subr.bf16.mxu0 0
  %1475 = vmatpush2.bf16.msra.mxu0 0
  %1476 = vmatprep.subr.bf16.mxu0 0
  %1477 = vmatpush2.bf16.msra.mxu0 0
  %1478 = vmatprep.subr.bf16.mxu0 0
  %1479 = vmatpush2.bf16.msra.mxu0 0
  %1480 = vmatprep.subr.bf16.mxu0 0
  %1481 = vmatpush2.bf16.msra.mxu0 0
  %1482 = vmatprep.subr.bf16.mxu0 0
  %1483 = vmatpush2.bf16.msra.mxu0 0
  %1484 = vmatprep.subr.bf16.mxu0 0
  %1485 = vmatpush2.bf16.msra.mxu0 0
  %1486 = vmatprep.subr.bf16.mxu0 0
  %1487 = vmatpush2.bf16.msra.mxu0 0
  %1488 = vmatprep.mubr.bf16.mxu0 0
  %1489 = vmatmul.mubr.bf16.gmra.mxu0 %v1454
  %v1490 = vpop.f32.mrf.mxu0
  %v1491 = vadd.f32 0.0, %v1490
  %v1492 = vpop.f32.mrf.mxu0
  %v1493 = vadd.f32 0.0, %v1492
  %v1494 = vpop.f32.mrf.mxu0
  %v1495 = vpop.f32.mrf.mxu0
  %1496 = vdwg.mxu0
  %v1497 = vadd.f32 %v1082, %v1491
  %v1498 = vadd.f32 %v1084, %v1493
  %v1499 = vxor.u32 %v1497, 2147483648
  %v1500 = vxor.u32 %v1498, 2147483648
  %v1501 = vmul.f32 %v1499, 1.442695
  %v1502 = vpow.pop %v1501
  %v1503 = vmul.f32 %v1500, 1.442695
  %v1504 = vpow.pop %v1503
  %v1505 = vadd.f32 %v1502, 1.0
  %v1506 = vadd.f32 %v1504, 1.0
  %v1507 = vrcp.pop %v1505
  %v1508 = vmul.f32 1.0, %v1507
  %v1509 = vrcp.pop %v1506
  %v1510 = vmul.f32 1.0, %v1509
  %v1511 = vtanh.pop %v1498
  %v1512 = vmul.f32 %v1508, %v1445
  %1514 = vrot.lane.b32.xlu0 %v1511, 64
  %v1515 = vpop.permute.xlu0 %1514
  %v1517 = vmul.f32 %v1508, %v1515
  %1519 = vrot.lane.b32.xlu0 %v1517, 64
  %v1520 = vpop.permute.xlu0 %1519
  %v1522 = vadd.f32 %v1512, %v1520
  %v1523 = vtanh.pop %v1522
  %1525 = vrot.lane.b32.xlu0 %v1523, 64
  %v1526 = vpop.permute.xlu0 %1525
  %v1528 = vmul.f32 %v1510, %v1526
  %v1529 = vpack.c.bf16 %v1528, %v1528
  %v1531 = vsel %vm251, %v1529, 0
  %1533 = vmatprep.subr.bf16.mxu0 0
  %1534 = vmatpush1.bf16.msra.mxu0 0
  %1535 = vmatprep.subr.bf16.mxu0 0
  %1536 = vmatpush1.bf16.msra.mxu0 0
  %1537 = vmatprep.subr.bf16.mxu0 0
  %1538 = vmatpush1.bf16.msra.mxu0 0
  %1539 = vmatprep.subr.bf16.mxu0 0
  %1540 = vmatpush1.bf16.msra.mxu0 0
  %1541 = vmatprep.subr.bf16.mxu0 %v1139
  %1542 = vmatpush1.bf16.msra.mxu0 %v1138
  %1543 = vmatprep.subr.bf16.mxu0 %v1137
  %1544 = vmatpush1.bf16.msra.mxu0 %v1136
  %1545 = vmatprep.subr.bf16.mxu0 %v1135
  %1546 = vmatpush1.bf16.msra.mxu0 %v1134
  %1547 = vmatprep.subr.bf16.mxu0 %v1133
  %1548 = vmatpush1.bf16.msra.mxu0 %v1132
  %1549 = vmatprep.subr.bf16.mxu0 0
  %1550 = vmatpush2.bf16.msra.mxu0 0
  %1551 = vmatprep.subr.bf16.mxu0 0
  %1552 = vmatpush2.bf16.msra.mxu0 0
  %1553 = vmatprep.subr.bf16.mxu0 0
  %1554 = vmatpush2.bf16.msra.mxu0 0
  %1555 = vmatprep.subr.bf16.mxu0 0
  %1556 = vmatpush2.bf16.msra.mxu0 0
  %1557 = vmatprep.subr.bf16.mxu0 0
  %1558 = vmatpush2.bf16.msra.mxu0 0
  %1559 = vmatprep.subr.bf16.mxu0 0
  %1560 = vmatpush2.bf16.msra.mxu0 0
  %1561 = vmatprep.subr.bf16.mxu0 0
  %1562 = vmatpush2.bf16.msra.mxu0 0
  %1563 = vmatprep.subr.bf16.mxu0 0
  %1564 = vmatpush2.bf16.msra.mxu0 0
  %1565 = vmatprep.mubr.bf16.mxu0 0
  %1566 = vmatmul.mubr.bf16.gmra.mxu0 %v1531
  %v1567 = vpop.f32.mrf.mxu0
  %v1568 = vadd.f32 0.0, %v1567
  %v1569 = vpop.f32.mrf.mxu0
  %v1570 = vadd.f32 0.0, %v1569
  %v1571 = vpop.f32.mrf.mxu0
  %v1572 = vpop.f32.mrf.mxu0
  %1573 = vdwg.mxu0
  %v1574 = vadd.f32 %v1086, %v1568
  %v1575 = vadd.f32 %v1088, %v1570
  %v1576 = vxor.u32 %v1574, 2147483648
  %v1577 = vxor.u32 %v1575, 2147483648
  %v1578 = vmul.f32 %v1576, 1.442695
  %v1579 = vpow.pop %v1578
  %v1580 = vmul.f32 %v1577, 1.442695
  %v1581 = vpow.pop %v1580
  %v1582 = vadd.f32 %v1579, 1.0
  %v1583 = vadd.f32 %v1581, 1.0
  %v1584 = vrcp.pop %v1582
  %v1585 = vmul.f32 1.0, %v1584
  %v1586 = vrcp.pop %v1583
  %v1587 = vmul.f32 1.0, %v1586
  %v1588 = vtanh.pop %v1575
  %v1589 = vmul.f32 %v1585, %v1522
  %1591 = vrot.lane.b32.xlu0 %v1588, 64
  %v1592 = vpop.permute.xlu0 %1591
  %v1594 = vmul.f32 %v1585, %v1592
  %1596 = vrot.lane.b32.xlu0 %v1594, 64
  %v1597 = vpop.permute.xlu0 %1596
  %v1599 = vadd.f32 %v1589, %v1597
  %v1600 = vtanh.pop %v1599
  %1602 = vrot.lane.b32.xlu0 %v1600, 64
  %v1603 = vpop.permute.xlu0 %1602
  %v1605 = vmul.f32 %v1587, %v1603
  %v1606 = vpack.c.bf16 %v1605, %v1605
  %v1608 = vsel %vm251, %v1606, 0
  %1610 = vmatprep.subr.bf16.mxu0 0
  %1611 = vmatpush1.bf16.msra.mxu0 0
  %1612 = vmatprep.subr.bf16.mxu0 0
  %1613 = vmatpush1.bf16.msra.mxu0 0
  %1614 = vmatprep.subr.bf16.mxu0 0
  %1615 = vmatpush1.bf16.msra.mxu0 0
  %1616 = vmatprep.subr.bf16.mxu0 0
  %1617 = vmatpush1.bf16.msra.mxu0 0
  %1618 = vmatprep.subr.bf16.mxu0 %v1139
  %1619 = vmatpush1.bf16.msra.mxu0 %v1138
  %1620 = vmatprep.subr.bf16.mxu0 %v1137
  %1621 = vmatpush1.bf16.msra.mxu0 %v1136
  %1622 = vmatprep.subr.bf16.mxu0 %v1135
  %1623 = vmatpush1.bf16.msra.mxu0 %v1134
  %1624 = vmatprep.subr.bf16.mxu0 %v1133
  %1625 = vmatpush1.bf16.msra.mxu0 %v1132
  %1626 = vmatprep.subr.bf16.mxu0 0
  %1627 = vmatpush2.bf16.msra.mxu0 0
  %1628 = vmatprep.subr.bf16.mxu0 0
  %1629 = vmatpush2.bf16.msra.mxu0 0
  %1630 = vmatprep.subr.bf16.mxu0 0
  %1631 = vmatpush2.bf16.msra.mxu0 0
  %1632 = vmatprep.subr.bf16.mxu0 0
  %1633 = vmatpush2.bf16.msra.mxu0 0
  %1634 = vmatprep.subr.bf16.mxu0 0
  %1635 = vmatpush2.bf16.msra.mxu0 0
  %1636 = vmatprep.subr.bf16.mxu0 0
  %1637 = vmatpush2.bf16.msra.mxu0 0
  %1638 = vmatprep.subr.bf16.mxu0 0
  %1639 = vmatpush2.bf16.msra.mxu0 0
  %1640 = vmatprep.subr.bf16.mxu0 0
  %1641 = vmatpush2.bf16.msra.mxu0 0
  %1642 = vmatprep.mubr.bf16.mxu0 0
  %1643 = vmatmul.mubr.bf16.gmra.mxu0 %v1608
  %v1644 = vpop.f32.mrf.mxu0
  %v1645 = vadd.f32 0.0, %v1644
  %v1646 = vpop.f32.mrf.mxu0
  %v1647 = vadd.f32 0.0, %v1646
  %v1648 = vpop.f32.mrf.mxu0
  %v1649 = vpop.f32.mrf.mxu0
  %1650 = vdwg.mxu0
  %v1651 = vadd.f32 %v1092, %v1645
  %v1652 = vadd.f32 %v1094, %v1647
  %v1653 = vxor.u32 %v1651, 2147483648
  %v1654 = vxor.u32 %v1652, 2147483648
  %v1655 = vmul.f32 %v1653, 1.442695
  %v1656 = vpow.pop %v1655
  %v1657 = vmul.f32 %v1654, 1.442695
  %v1658 = vpow.pop %v1657
  %v1659 = vadd.f32 %v1656, 1.0
  %v1660 = vadd.f32 %v1658, 1.0
  %v1661 = vrcp.pop %v1659
  %v1662 = vmul.f32 1.0, %v1661
  %v1663 = vrcp.pop %v1660
  %v1664 = vmul.f32 1.0, %v1663
  %v1665 = vtanh.pop %v1652
  %v1666 = vmul.f32 %v1662, %v1599
  %1668 = vrot.lane.b32.xlu0 %v1665, 64
  %v1669 = vpop.permute.xlu0 %1668
  %v1671 = vmul.f32 %v1662, %v1669
  %1673 = vrot.lane.b32.xlu0 %v1671, 64
  %v1674 = vpop.permute.xlu0 %1673
  %v1676 = vadd.f32 %v1666, %v1674
  %v1677 = vtanh.pop %v1676
  %1679 = vrot.lane.b32.xlu0 %v1677, 64
  %v1680 = vpop.permute.xlu0 %1679
  %v1682 = vmul.f32 %v1664, %v1680
  %v1683 = vpack.c.bf16 %v1682, %v1682
  %v1685 = vsel %vm251, %v1683, 0
  %1687 = vmatprep.subr.bf16.mxu0 0
  %1688 = vmatpush1.bf16.msra.mxu0 0
  %1689 = vmatprep.subr.bf16.mxu0 0
  %1690 = vmatpush1.bf16.msra.mxu0 0
  %1691 = vmatprep.subr.bf16.mxu0 0
  %1692 = vmatpush1.bf16.msra.mxu0 0
  %1693 = vmatprep.subr.bf16.mxu0 0
  %1694 = vmatpush1.bf16.msra.mxu0 0
  %1695 = vmatprep.subr.bf16.mxu0 %v1139
  %1696 = vmatpush1.bf16.msra.mxu0 %v1138
  %1697 = vmatprep.subr.bf16.mxu0 %v1137
  %1698 = vmatpush1.bf16.msra.mxu0 %v1136
  %1699 = vmatprep.subr.bf16.mxu0 %v1135
  %1700 = vmatpush1.bf16.msra.mxu0 %v1134
  %1701 = vmatprep.subr.bf16.mxu0 %v1133
  %1702 = vmatpush1.bf16.msra.mxu0 %v1132
  %1703 = vmatprep.subr.bf16.mxu0 0
  %1704 = vmatpush2.bf16.msra.mxu0 0
  %1705 = vmatprep.subr.bf16.mxu0 0
  %1706 = vmatpush2.bf16.msra.mxu0 0
  %1707 = vmatprep.subr.bf16.mxu0 0
  %1708 = vmatpush2.bf16.msra.mxu0 0
  %1709 = vmatprep.subr.bf16.mxu0 0
  %1710 = vmatpush2.bf16.msra.mxu0 0
  %1711 = vmatprep.subr.bf16.mxu0 0
  %1712 = vmatpush2.bf16.msra.mxu0 0
  %1713 = vmatprep.subr.bf16.mxu0 0
  %1714 = vmatpush2.bf16.msra.mxu0 0
  %1715 = vmatprep.subr.bf16.mxu0 0
  %1716 = vmatpush2.bf16.msra.mxu0 0
  %1717 = vmatprep.subr.bf16.mxu0 0
  %1718 = vmatpush2.bf16.msra.mxu0 0
  %1719 = vmatprep.mubr.bf16.mxu0 0
  %1720 = vmatmul.mubr.bf16.gmra.mxu0 %v1685
  %v1721 = vpop.f32.mrf.mxu0
  %v1722 = vadd.f32 0.0, %v1721
  %v1723 = vpop.f32.mrf.mxu0
  %v1724 = vadd.f32 0.0, %v1723
  %v1725 = vpop.f32.mrf.mxu0
  %v1726 = vpop.f32.mrf.mxu0
  %1727 = vdwg.mxu0
  %v1728 = vadd.f32 %v1096, %v1722
  %v1729 = vadd.f32 %v1098, %v1724
  %v1730 = vxor.u32 %v1728, 2147483648
  %v1731 = vxor.u32 %v1729, 2147483648
  %v1732 = vmul.f32 %v1730, 1.442695
  %v1733 = vpow.pop %v1732
  %v1734 = vmul.f32 %v1731, 1.442695
  %v1735 = vpow.pop %v1734
  %v1736 = vadd.f32 %v1733, 1.0
  %v1737 = vadd.f32 %v1735, 1.0
  %v1738 = vrcp.pop %v1736
  %v1739 = vmul.f32 1.0, %v1738
  %v1740 = vrcp.pop %v1737
  %v1741 = vmul.f32 1.0, %v1740
  %v1742 = vtanh.pop %v1729
  %v1743 = vmul.f32 %v1739, %v1676
  %1745 = vrot.lane.b32.xlu0 %v1742, 64
  %v1746 = vpop.permute.xlu0 %1745
  %v1748 = vmul.f32 %v1739, %v1746
  %1750 = vrot.lane.b32.xlu0 %v1748, 64
  %v1751 = vpop.permute.xlu0 %1750
  %v1753 = vadd.f32 %v1743, %v1751
  %v1754 = vtanh.pop %v1753
  %1756 = vrot.lane.b32.xlu0 %v1754, 64
  %v1757 = vpop.permute.xlu0 %1756
  %v1759 = vmul.f32 %v1741, %v1757
  %v1760 = vsel %vm117, %v1220, %v1759
  %v1761 = vsel %vm117, %v1297, %v1682
  %v1762 = vsel %vm117, %v1374, %v1605
  %v1763 = vsel %vm117, %v1451, %v1528
  %v1764 = vsel %vm117, %v1528, %v1451
  %v1765 = vsel %vm117, %v1605, %v1374
  %v1766 = vsel %vm117, %v1682, %v1297
  %v1767 = vsel %vm117, %v1759, %v1220
  %v1768 = vld [vmem:[%s7] sm:$0xf]
  %v1769 = vld [vmem:[%s7 + $0x4] sm:$0xf]
  %v1770 = vld [vmem:[%s7 + $0x8] sm:$0xf]
  %v1771 = vld [vmem:[%s7 + $0xc] sm:$0xf]
  %v1772 = vld [vmem:[%s7 + $0x10] sm:$0xf]
  %v1773 = vld [vmem:[%s7 + $0x14] sm:$0xf]
  %v1774 = vld [vmem:[%s7 + $0x18] sm:$0xf]
  %v1775 = vld [vmem:[%s7 + $0x1c] sm:$0xf]
  %v1776 = vld [vmem:[%s8] sm:$0x1]
  %v1777 = vpack.c.bf16 %v1761, %v1760
  %v1778 = vpack.c.bf16 %v1763, %v1762
  %v1779 = vpack.c.bf16 %v1765, %v1764
  %v1780 = vpack.c.bf16 %v1767, %v1766
  %v1782 = vlaneseq
  %v1783 = vshrl.u32 %v1782, 7
  %v1784 = vsub.s32 0, %v1783
  %v1785 = vrot.slane %v1776, %v1784
  %v1795 = vunpack.c.l.b16 %v1768
  %v1796 = vunpack.c.l.b16 %v1769
  %v1797 = vunpack.c.l.b16 %v1770
  %v1798 = vunpack.c.l.b16 %v1771
  %v1799 = vunpack.c.l.b16 %v1772
  %v1800 = vunpack.c.l.b16 %v1773
  %v1801 = vunpack.c.l.b16 %v1774
  %v1802 = vunpack.c.l.b16 %v1775
  %v1803 = vpack.c.b16 %v1796, %v1795
  %v1804 = vpack.c.b16 %v1798, %v1797
  %v1805 = vpack.c.b16 %v1800, %v1799
  %v1806 = vpack.c.b16 %v1802, %v1801
  %v1812 = vsel %vm251, %v1777, 0
  %v1815 = vsel %vm251, %v1778, 0
  %v1818 = vsel %vm251, %v1779, 0
  %v1821 = vsel %vm251, %v1780, 0
  %1823 = vmatprep.subr.bf16.mxu0 0
  %1824 = vmatpush1.bf16.msra.mxu0 0
  %1825 = vmatprep.subr.bf16.mxu0 0
  %1826 = vmatpush1.bf16.msra.mxu0 0
  %1827 = vmatprep.subr.bf16.mxu0 0
  %1828 = vmatpush1.bf16.msra.mxu0 0
  %1829 = vmatprep.subr.bf16.mxu0 0
  %1830 = vmatpush1.bf16.msra.mxu0 0
  %1831 = vmatprep.subr.bf16.mxu0 0
  %1832 = vmatpush1.bf16.msra.mxu0 %v1806
  %1833 = vmatprep.subr.bf16.mxu0 0
  %1834 = vmatpush1.bf16.msra.mxu0 %v1805
  %1835 = vmatprep.subr.bf16.mxu0 0
  %1836 = vmatpush1.bf16.msra.mxu0 %v1804
  %1837 = vmatprep.subr.bf16.mxu0 0
  %1838 = vmatpush1.bf16.msra.mxu0 %v1803
  %1839 = vmatprep.subr.bf16.mxu0 0
  %1840 = vmatpush2.bf16.msra.mxu0 0
  %1841 = vmatprep.subr.bf16.mxu0 0
  %1842 = vmatpush2.bf16.msra.mxu0 0
  %1843 = vmatprep.subr.bf16.mxu0 0
  %1844 = vmatpush2.bf16.msra.mxu0 0
  %1845 = vmatprep.subr.bf16.mxu0 0
  %1846 = vmatpush2.bf16.msra.mxu0 0
  %1847 = vmatprep.subr.bf16.mxu0 0
  %1848 = vmatpush2.bf16.msra.mxu0 0
  %1849 = vmatprep.subr.bf16.mxu0 0
  %1850 = vmatpush2.bf16.msra.mxu0 0
  %1851 = vmatprep.subr.bf16.mxu0 0
  %1852 = vmatpush2.bf16.msra.mxu0 0
  %1853 = vmatprep.subr.bf16.mxu0 0
  %1854 = vmatpush2.bf16.msra.mxu0 0
  %1855 = vmatprep.mubr.bf16.mxu0 0
  %1856 = vmatmul.mubr.bf16.gmra.mxu0 %v1812
  %v1857 = vpop.f32.mrf.mxu0
  %v1858 = vadd.f32 %v1785, %v1857
  %v1859 = vpop.f32.mrf.mxu0
  %v1860 = vpop.f32.mrf.mxu0
  %v1861 = vadd.f32 %v1785, %v1860
  %v1862 = vpop.f32.mrf.mxu0
  %1863 = vmatprep.mubr.bf16.mxu0 0
  %1864 = vmatmul.mubr.bf16.gmra.mxu0 %v1815
  %v1865 = vpop.f32.mrf.mxu0
  %v1866 = vadd.f32 %v1785, %v1865
  %v1867 = vpop.f32.mrf.mxu0
  %v1868 = vpop.f32.mrf.mxu0
  %v1869 = vadd.f32 %v1785, %v1868
  %v1870 = vpop.f32.mrf.mxu0
  %1871 = vmatprep.mubr.bf16.mxu0 0
  %1872 = vmatmul.mubr.bf16.gmra.mxu0 %v1818
  %v1873 = vpop.f32.mrf.mxu0
  %v1874 = vadd.f32 %v1785, %v1873
  %v1875 = vpop.f32.mrf.mxu0
  %v1876 = vpop.f32.mrf.mxu0
  %v1877 = vadd.f32 %v1785, %v1876
  %v1878 = vpop.f32.mrf.mxu0
  %1879 = vmatprep.mubr.bf16.mxu0 0
  %1880 = vmatmul.mubr.bf16.gmra.mxu0 %v1821
  %v1881 = vpop.f32.mrf.mxu0
  %v1882 = vadd.f32 %v1785, %v1881
  %v1883 = vpop.f32.mrf.mxu0
  %v1884 = vpop.f32.mrf.mxu0
  %v1885 = vadd.f32 %v1785, %v1884
  %v1886 = vpop.f32.mrf.mxu0
  %1887 = vdwg.mxu0
  %v1888 = vtanh.pop %v1858
  %v1889 = vtanh.pop %v1861
  %v1890 = vtanh.pop %v1866
  %v1891 = vtanh.pop %v1869
  %v1892 = vtanh.pop %v1874
  %v1893 = vtanh.pop %v1877
  %v1894 = vtanh.pop %v1882
  %v1895 = vtanh.pop %v1885
  %v1896 = vld [vmem:[%s9] sm:$0xf]
  %v1897 = vld [vmem:[%s9 + $0x4] sm:$0xf]
  %v1898 = vld [vmem:[%s9 + $0x8] sm:$0xf]
  %v1899 = vld [vmem:[%s9 + $0xc] sm:$0xf]
  %v1900 = vld [vmem:[#allocation2] sm:$0x1]
  %v1901 = vpack.c.bf16 %v1889, %v1888
  %v1902 = vpack.c.bf16 %v1891, %v1890
  %v1903 = vpack.c.bf16 %v1893, %v1892
  %v1904 = vpack.c.bf16 %v1895, %v1894
  %v1906 = vlaneseq
  %v1907 = vshrl.u32 %v1906, 7
  %v1908 = vsub.s32 0, %v1907
  %v1909 = vrot.slane %v1900, %v1908
  %v1915 = vunpack.c.l.b16 %v1896
  %v1916 = vunpack.c.l.b16 %v1897
  %v1917 = vunpack.c.l.b16 %v1898
  %v1918 = vunpack.c.l.b16 %v1899
  %v1919 = vpack.c.b16 %v1916, %v1915
  %v1920 = vpack.c.b16 %v1918, %v1917
  %v1924 = vsel %vm117, %v1901, 0
  %v1927 = vsel %vm117, %v1902, 0
  %v1930 = vsel %vm117, %v1903, 0
  %v1933 = vsel %vm117, %v1904, 0
  %1935 = vmatprep.subr.bf16.mxu0 0
  %1936 = vmatpush1.bf16.msra.mxu0 0
  %1937 = vmatprep.subr.bf16.mxu0 0
  %1938 = vmatpush1.bf16.msra.mxu0 0
  %1939 = vmatprep.subr.bf16.mxu0 0
  %1940 = vmatpush1.bf16.msra.mxu0 0
  %1941 = vmatprep.subr.bf16.mxu0 0
  %1942 = vmatpush1.bf16.msra.mxu0 0
  %1943 = vmatprep.subr.bf16.mxu0 0
  %1944 = vmatpush1.bf16.msra.mxu0 0
  %1945 = vmatprep.subr.bf16.mxu0 0
  %1946 = vmatpush1.bf16.msra.mxu0 0
  %1947 = vmatprep.subr.bf16.mxu0 0
  %1948 = vmatpush1.bf16.msra.mxu0 %v1920
  %1949 = vmatprep.subr.bf16.mxu0 0
  %1950 = vmatpush1.bf16.msra.mxu0 %v1919
  %1951 = vmatprep.subr.bf16.mxu0 0
  %1952 = vmatpush2.bf16.msra.mxu0 0
  %1953 = vmatprep.subr.bf16.mxu0 0
  %1954 = vmatpush2.bf16.msra.mxu0 0
  %1955 = vmatprep.subr.bf16.mxu0 0
  %1956 = vmatpush2.bf16.msra.mxu0 0
  %1957 = vmatprep.subr.bf16.mxu0 0
  %1958 = vmatpush2.bf16.msra.mxu0 0
  %1959 = vmatprep.subr.bf16.mxu0 0
  %1960 = vmatpush2.bf16.msra.mxu0 0
  %1961 = vmatprep.subr.bf16.mxu0 0
  %1962 = vmatpush2.bf16.msra.mxu0 0
  %1963 = vmatprep.subr.bf16.mxu0 0
  %1964 = vmatpush2.bf16.msra.mxu0 0
  %1965 = vmatprep.subr.bf16.mxu0 0
  %1966 = vmatpush2.bf16.msra.mxu0 0
  %1967 = vmatprep.mubr.bf16.mxu0 0
  %1968 = vmatmul.mubr.bf16.gmra.mxu0 %v1924
  %v1969 = vpop.f32.mrf.mxu0
  %v1970 = vadd.f32 %v1909, %v1969
  %v1971 = vpop.f32.mrf.mxu0
  %v1972 = vpop.f32.mrf.mxu0
  %v1973 = vadd.f32 %v1909, %v1972
  %v1974 = vpop.f32.mrf.mxu0
  %1975 = vmatprep.mubr.bf16.mxu0 0
  %1976 = vmatmul.mubr.bf16.gmra.mxu0 %v1927
  %v1977 = vpop.f32.mrf.mxu0
  %v1978 = vadd.f32 %v1909, %v1977
  %v1979 = vpop.f32.mrf.mxu0
  %v1980 = vpop.f32.mrf.mxu0
  %v1981 = vadd.f32 %v1909, %v1980
  %v1982 = vpop.f32.mrf.mxu0
  %1983 = vmatprep.mubr.bf16.mxu0 0
  %1984 = vmatmul.mubr.bf16.gmra.mxu0 %v1930
  %v1985 = vpop.f32.mrf.mxu0
  %v1986 = vadd.f32 %v1909, %v1985
  %v1987 = vpop.f32.mrf.mxu0
  %v1988 = vpop.f32.mrf.mxu0
  %v1989 = vadd.f32 %v1909, %v1988
  %v1990 = vpop.f32.mrf.mxu0
  %1991 = vmatprep.mubr.bf16.mxu0 0
  %1992 = vmatmul.mubr.bf16.gmra.mxu0 %v1933
  %v1993 = vpop.f32.mrf.mxu0
  %v1994 = vadd.f32 %v1909, %v1993
  %v1995 = vpop.f32.mrf.mxu0
  %v1996 = vpop.f32.mrf.mxu0
  %v1997 = vadd.f32 %v1909, %v1996
  %v1998 = vpop.f32.mrf.mxu0
  %1999 = vdwg.mxu0
  %2001 = vrot.lane.b32.xlu0 %v1973, 1
  %v2002 = vpop.permute.xlu0 %2001
  %2005 = vrot.lane.b32.xlu0 %v1978, 2
  %v2006 = vpop.permute.xlu0 %2005
  %2009 = vrot.lane.b32.xlu0 %v1981, 3
  %v2010 = vpop.permute.xlu0 %2009
  %2013 = vrot.lane.b32.xlu0 %v1986, 4
  %v2014 = vpop.permute.xlu0 %2013
  %2017 = vrot.lane.b32.xlu0 %v1989, 5
  %v2018 = vpop.permute.xlu0 %2017
  %2021 = vrot.lane.b32.xlu0 %v1994, 6
  %v2022 = vpop.permute.xlu0 %2021
  %2025 = vrot.lane.b32.xlu0 %v1997, 7
  %v2026 = vpop.permute.xlu0 %2025
  %vm2028 = vcmask 7168
  %v2029 = vsel %vm2028, %v1970, %v2002
  %vm2030 = vcmask 15360
  %v2031 = vsel %vm2030, %v2029, %v2006
  %vm2032 = vcmask 23552
  %v2033 = vsel %vm2032, %v2031, %v2010
  %vm2034 = vcmask 31744
  %v2035 = vsel %vm2034, %v2033, %v2014
  %vm2036 = vcmask 39936
  %v2037 = vsel %vm2036, %v2035, %v2018
  %vm2038 = vcmask 48128
  %v2039 = vsel %vm2038, %v2037, %v2022
  %vm2040 = vcmask 56320
  %v2041 = vsel %vm2040, %v2039, %v2026
  %vm2042 = vcmask 64512
  %v2043 = vsel %vm2042, %v2041, -inf
  %2044 = vmax.xlane.f32.xlu0 %v2043
  %v2045 = vpop.xlane.xlu0 %2044
  %v2046 = vsub.f32 %v2041, %v2045
  %v2047 = vmul.f32 %v2046, 1.442695
  %v2048 = vpow.pop %v2047
  %v2049 = vsel %vm2042, %v2048, 0.0
  %2050 = vadd.xlane.f32.xlu0 %v2049
  %v2051 = vpop.xlane.xlu0 %2050
  %v2052 = vrcp.pop %v2051
  %v2053 = vmul.f32 %v2048, %v2052
  %2055 = vset.pattern.permute.xlu0 0
  %2056 = vperm.xlu0 %2055, %v2053
  %v2057 = vpop.permute.xlu0 %2056
  %v2059 = vmul.f32 %v2057, %v1760
  %2060 = vset.pattern.permute.xlu0 1
  %2061 = vperm.xlu0 %2060, %v2053
  %v2062 = vpop.permute.xlu0 %2061
  %v2064 = vmul.f32 %v2062, %v1761
  %v2065 = vadd.f32 %v2059, %v2064
  %2066 = vset.pattern.permute.xlu0 2
  %2067 = vperm.xlu0 %2066, %v2053
  %v2068 = vpop.permute.xlu0 %2067
  %v2070 = vmul.f32 %v2068, %v1762
  %v2071 = vadd.f32 %v2065, %v2070
  %2072 = vset.pattern.permute.xlu0 3
  %2073 = vperm.xlu0 %2072, %v2053
  %v2074 = vpop.permute.xlu0 %2073
  %v2076 = vmul.f32 %v2074, %v1763
  %v2077 = vadd.f32 %v2071, %v2076
  %2078 = vset.pattern.permute.xlu0 4
  %2079 = vperm.xlu0 %2078, %v2053
  %v2080 = vpop.permute.xlu0 %2079
  %v2082 = vmul.f32 %v2080, %v1764
  %v2083 = vadd.f32 %v2077, %v2082
  %2084 = vset.pattern.permute.xlu0 5
  %2085 = vperm.xlu0 %2084, %v2053
  %v2086 = vpop.permute.xlu0 %2085
  %v2088 = vmul.f32 %v2086, %v1765
  %v2089 = vadd.f32 %v2083, %v2088
  %2090 = vset.pattern.permute.xlu0 6
  %2091 = vperm.xlu0 %2090, %v2053
  %v2092 = vpop.permute.xlu0 %2091
  %v2094 = vmul.f32 %v2092, %v1766
  %v2095 = vadd.f32 %v2089, %v2094
  %2096 = vset.pattern.permute.xlu0 7
  %2097 = vperm.xlu0 %2096, %v2053
  %v2098 = vpop.permute.xlu0 %2097
  %v2100 = vmul.f32 %v2098, %v1767
  %v2101 = vadd.f32 %v2095, %v2100
  %v2102 = vld [vmem:[%s11] sm:$0xf]
  %v2103 = vld [vmem:[%s11 + $0x4] sm:$0xf]
  %v2104 = vld [vmem:[%s11 + $0x8] sm:$0xf]
  %v2105 = vld [vmem:[%s11 + $0xc] sm:$0xf]
  %v2106 = vld [vmem:[%s11 + $0x10] sm:$0xf]
  %v2107 = vld [vmem:[%s11 + $0x14] sm:$0xf]
  %v2108 = vld [vmem:[%s11 + $0x18] sm:$0xf]
  %v2109 = vld [vmem:[%s11 + $0x1c] sm:$0xf]
  %v2110 = vld [vmem:[%s12] sm:$0x1]
  %v2111 = vpack.c.bf16 %v2101, %v2101
  %v2113 = vlaneseq
  %v2114 = vshrl.u32 %v2113, 7
  %v2115 = vsub.s32 0, %v2114
  %v2116 = vrot.slane %v2110, %v2115
  %v2126 = vunpack.c.l.b16 %v2102
  %v2127 = vunpack.c.l.b16 %v2103
  %v2128 = vunpack.c.l.b16 %v2104
  %v2129 = vunpack.c.l.b16 %v2105
  %v2130 = vunpack.c.l.b16 %v2106
  %v2131 = vunpack.c.l.b16 %v2107
  %v2132 = vunpack.c.l.b16 %v2108
  %v2133 = vunpack.c.l.b16 %v2109
  %v2134 = vpack.c.b16 %v2127, %v2126
  %v2135 = vpack.c.b16 %v2129, %v2128
  %v2136 = vpack.c.b16 %v2131, %v2130
  %v2137 = vpack.c.b16 %v2133, %v2132
  %v2143 = vsel %vm251, %v2111, 0
  %2145 = vmatprep.subr.bf16.mxu0 0
  %2146 = vmatpush1.bf16.msra.mxu0 0
  %2147 = vmatprep.subr.bf16.mxu0 0
  %2148 = vmatpush1.bf16.msra.mxu0 0
  %2149 = vmatprep.subr.bf16.mxu0 0
  %2150 = vmatpush1.bf16.msra.mxu0 0
  %2151 = vmatprep.subr.bf16.mxu0 0
  %2152 = vmatpush1.bf16.msra.mxu0 0
  %2153 = vmatprep.subr.bf16.mxu0 0
  %2154 = vmatpush1.bf16.msra.mxu0 %v2137
  %2155 = vmatprep.subr.bf16.mxu0 0
  %2156 = vmatpush1.bf16.msra.mxu0 %v2136
  %2157 = vmatprep.subr.bf16.mxu0 0
  %2158 = vmatpush1.bf16.msra.mxu0 %v2135
  %2159 = vmatprep.subr.bf16.mxu0 0
  %2160 = vmatpush1.bf16.msra.mxu0 %v2134
  %2161 = vmatprep.subr.bf16.mxu0 0
  %2162 = vmatpush2.bf16.msra.mxu0 0
  %2163 = vmatprep.subr.bf16.mxu0 0
  %2164 = vmatpush2.bf16.msra.mxu0 0
  %2165 = vmatprep.subr.bf16.mxu0 0
  %2166 = vmatpush2.bf16.msra.mxu0 0
  %2167 = vmatprep.subr.bf16.mxu0 0
  %2168 = vmatpush2.bf16.msra.mxu0 0
  %2169 = vmatprep.subr.bf16.mxu0 0
  %2170 = vmatpush2.bf16.msra.mxu0 0
  %2171 = vmatprep.subr.bf16.mxu0 0
  %2172 = vmatpush2.bf16.msra.mxu0 0
  %2173 = vmatprep.subr.bf16.mxu0 0
  %2174 = vmatpush2.bf16.msra.mxu0 0
  %2175 = vmatprep.subr.bf16.mxu0 0
  %2176 = vmatpush2.bf16.msra.mxu0 0
  %2177 = vmatprep.mubr.bf16.mxu0 0
  %2178 = vmatmul.mubr.bf16.gmra.mxu0 %v2143
  %v2179 = vpop.f32.mrf.mxu0
  %v2180 = vadd.f32 %v2116, %v2179
  %v2181 = vpop.f32.mrf.mxu0
  %v2182 = vpop.f32.mrf.mxu0
  %v2183 = vpop.f32.mrf.mxu0
  %2184 = vdwg.mxu0
  %v2185 = vmax.f32 %v2180, 0.0
  %v2186 = vld [vmem:[%s13] sm:$0xf]
  %v2187 = vld [vmem:[%s13 + $0x4] sm:$0xf]
  %v2188 = vld [vmem:[%s13 + $0x8] sm:$0xf]
  %v2189 = vld [vmem:[%s13 + $0xc] sm:$0xf]
  %v2190 = vld [vmem:[%s13 + $0x10] sm:$0xf]
  %v2191 = vld [vmem:[%s13 + $0x14] sm:$0xf]
  %v2192 = vld [vmem:[%s13 + $0x18] sm:$0xf]
  %v2193 = vld [vmem:[%s13 + $0x1c] sm:$0xf]
  %v2194 = vld [vmem:[%s13 + $0x20] sm:$0xf]
  %v2195 = vld [vmem:[%s13 + $0x24] sm:$0xf]
  %v2196 = vld [vmem:[%s13 + $0x28] sm:$0xf]
  %v2197 = vld [vmem:[%s13 + $0x2c] sm:$0xf]
  %v2198 = vld [vmem:[%s14] sm:$0x1]
  %v2199 = vpack.c.bf16 %v2185, %v2185
  %v2201 = vlaneseq
  %v2202 = vshrl.u32 %v2201, 7
  %v2203 = vsub.s32 0, %v2202
  %v2204 = vrot.slane %v2198, %v2203
  %v2218 = vunpack.c.l.b16 %v2186
  %v2219 = vunpack.c.l.b16 %v2187
  %v2220 = vunpack.c.l.b16 %v2188
  %v2221 = vunpack.c.l.b16 %v2189
  %v2222 = vunpack.c.l.b16 %v2190
  %v2223 = vunpack.c.l.b16 %v2191
  %v2224 = vunpack.c.l.b16 %v2192
  %v2225 = vunpack.c.l.b16 %v2193
  %v2226 = vunpack.c.l.b16 %v2194
  %v2227 = vunpack.c.l.b16 %v2195
  %v2228 = vunpack.c.l.b16 %v2196
  %v2229 = vunpack.c.l.b16 %v2197
  %v2230 = vpack.c.b16 %v2219, %v2218
  %v2231 = vpack.c.b16 %v2221, %v2220
  %v2232 = vpack.c.b16 %v2223, %v2222
  %v2233 = vpack.c.b16 %v2225, %v2224
  %v2234 = vpack.c.b16 %v2227, %v2226
  %v2235 = vpack.c.b16 %v2229, %v2228
  %vm2242 = vcmask 785408
  %v2244 = vsel %vm2242, %v2199, 0
  %2246 = vmatprep.subr.bf16.mxu0 0
  %2247 = vmatpush1.bf16.msra.mxu0 0
  %2248 = vmatprep.subr.bf16.mxu0 0
  %2249 = vmatpush1.bf16.msra.mxu0 0
  %2250 = vmatprep.subr.bf16.mxu0 0
  %2251 = vmatpush1.bf16.msra.mxu0 %v2235
  %2252 = vmatprep.subr.bf16.mxu0 0
  %2253 = vmatpush1.bf16.msra.mxu0 %v2234
  %2254 = vmatprep.subr.bf16.mxu0 0
  %2255 = vmatpush1.bf16.msra.mxu0 %v2233
  %2256 = vmatprep.subr.bf16.mxu0 0
  %2257 = vmatpush1.bf16.msra.mxu0 %v2232
  %2258 = vmatprep.subr.bf16.mxu0 0
  %2259 = vmatpush1.bf16.msra.mxu0 %v2231
  %2260 = vmatprep.subr.bf16.mxu0 0
  %2261 = vmatpush1.bf16.msra.mxu0 %v2230
  %2262 = vmatprep.subr.bf16.mxu0 0
  %2263 = vmatpush2.bf16.msra.mxu0 0
  %2264 = vmatprep.subr.bf16.mxu0 0
  %2265 = vmatpush2.bf16.msra.mxu0 0
  %2266 = vmatprep.subr.bf16.mxu0 0
  %2267 = vmatpush2.bf16.msra.mxu0 0
  %2268 = vmatprep.subr.bf16.mxu0 0
  %2269 = vmatpush2.bf16.msra.mxu0 0
  %2270 = vmatprep.subr.bf16.mxu0 0
  %2271 = vmatpush2.bf16.msra.mxu0 0
  %2272 = vmatprep.subr.bf16.mxu0 0
  %2273 = vmatpush2.bf16.msra.mxu0 0
  %2274 = vmatprep.subr.bf16.mxu0 0
  %2275 = vmatpush2.bf16.msra.mxu0 0
  %2276 = vmatprep.subr.bf16.mxu0 0
  %2277 = vmatpush2.bf16.msra.mxu0 0
  %2278 = vmatprep.mubr.bf16.mxu0 0
  %2279 = vmatmul.mubr.bf16.gmra.mxu0 %v2244
  %v2280 = vpop.f32.mrf.mxu0
  %v2281 = vadd.f32 %v2204, %v2280
  %v2282 = vpop.f32.mrf.mxu0
  %v2283 = vpop.f32.mrf.mxu0
  %v2284 = vpop.f32.mrf.mxu0
  %2285 = vdwg.mxu0
  %v2286 = vxor.u32 %v2281, 2147483648
  %v2287 = vmul.f32 %v2286, 1.442695
  %v2288 = vpow.pop %v2287
  %v2289 = vadd.f32 %v2288, 1.0
  %v2290 = vrcp.pop %v2289
  %v2291 = vmul.f32 1.0, %v2290
  %v2292 = vsel %vm2034, %v2281, %v2291
  %2293 = vst.msk [vmem:[%s15] sm:$0xff] %vm2036, %v2292
  // Predicated region
  $region62: #{forward.1} parent=0 // pred_check
    _
  $region63: #{forward.1} parent=0 // pred_check_branch
    %2295 = sbr.rel (0) target = $region65
  $region64: #{forward.1} parent=0 // pred_region
    _
  $region65: #{forward.1} parent=0 // pred_fallthru
    _
  // Predicated region
  $region66: #{forward.1} parent=0 // pred_check
    _
  $region67: #{forward.1} parent=0 // pred_check_branch
    %2297 = sbr.rel (0) target = $region69
  $region68: #{forward.1} parent=0 // pred_region
    _
  $region69: #{forward.1} parent=0 // pred_fallthru
    _

</llo_original>
